<compile_context>
chip_gen: v5e
topology: v5e:2x2
jax: 0.10.0
libtpu: 0.0.40
codegen_flags: <defaults>
</compile_context>

<pallas_src>
import numpy as np
import jax
import jax.numpy as jnp
from jax.experimental import pallas as pl
from jax.experimental.pallas import tpu as pltpu

# ----------------------------- model config ---------------------------------
P = 3            # input feature size
NHIDDEN = 32     # module-level nhidden
NUM_LAYERS = 2   # module-level num_layers
B = 2            # batch
T = 8            # sequence length


# --------------------------- fused RNN kernel --------------------------------
def fused_rnn_kernel(x_ref, h0_ref, w_ref, b_ref, out_ref, hT_ref):
    """Both GRU layers + decoder, fully unrolled, hidden states carried in vregs.

    x_ref  : (T*B, 32)   time-major input rows (row = t*B + b), features zero-padded to H
    h0_ref : (2, B, 32)  initial hidden
    w_ref  : (4, 32, 96) [W_ih0^T (zero-padded rows), W_hh0^T, W_ih1^T, W_hh1^T],
             gate order (r, z, n) along the 96 lanes
    b_ref  : (4, 96)     row0 = b_in0 (r,z hh-biases folded), row1 = b_in1,
             row2 = [b_hh_n0 | b_hh_n1 | dec_w], row3 = [dec_b, 0, ...]
    out_ref: (T*B, 1)    time-major decoder output
    hT_ref : (2, B, 32)  final hidden
    """
    H = NHIDDEN
    bsz = h0_ref.shape[1]
    n_steps = x_ref.shape[0] // bsz

    # Static slab carving (zero-cost views / single loads).
    wih0 = w_ref[0]                      # (32, 96)
    whh0 = w_ref[1]                      # (32, 96)
    wih1 = w_ref[2]                      # (32, 96)
    whh1 = w_ref[3]                      # (32, 96)
    b = b_ref[...]                       # (4, 96)
    b_in0 = b[0:1, :]                    # (1, 96)
    b_in1 = b[1:2, :]                    # (1, 96)
    bhh_n0 = b[2:3, 0:H]                 # (1, 32)
    bhh_n1 = b[2:3, H:2 * H]             # (1, 32)
    dec_w = b[2:3, 2 * H:3 * H]          # (1, 32)
    dec_b = b[3:4, 0:1]                  # (1, 1)

    # Hoisted layer-0 input projection (off the serial chain):
    # one (T*B, 32) @ (32, 96) matmul for all steps and all three gates.
    gi0_all = jnp.dot(x_ref[...], wih0, preferred_element_type=jnp.float32) + b_in0

    h0 = h0_ref[0]                       # (B, 32) layer-0 hidden
    h1 = h0_ref[1]                       # (B, 32) layer-1 hidden

    for t in range(n_steps):             # T static -> fully unrolled, one basic block
        sl = slice(t * bsz, (t + 1) * bsz)

        # ---- layer 0, step t: single fused hh matmul, gates sliced from lanes ----
        gi0 = gi0_all[sl, :]                                             # (B, 96)
        gh0 = jnp.dot(h0, whh0, preferred_element_type=jnp.float32)      # (B, 96)
        r0 = jax.nn.sigmoid(gi0[:, 0:H] + gh0[:, 0:H])
        z0 = jax.nn.sigmoid(gi0[:, H:2 * H] + gh0[:, H:2 * H])
        n0 = jnp.tanh(gi0[:, 2 * H:] + r0 * (gh0[:, 2 * H:] + bhh_n0))
        h0 = (1.0 - z0) * n0 + z0 * h0

        # ---- layer 1, step t (input = h0 of this step; no sequence barrier) ----
        gi1 = jnp.dot(h0, wih1, preferred_element_type=jnp.float32) + b_in1
        gh1 = jnp.dot(h1, whh1, preferred_element_type=jnp.float32)
        r1 = jax.nn.sigmoid(gi1[:, 0:H] + gh1[:, 0:H])
        z1 = jax.nn.sigmoid(gi1[:, H:2 * H] + gh1[:, H:2 * H])
        n1 = jnp.tanh(gi1[:, 2 * H:] + r1 * (gh1[:, 2 * H:] + bhh_n1))
        h1 = (1.0 - z1) * n1 + z1 * h1

        # ---- decoder for this step (VPU multiply + lane sum; off the serial chain) ----
        out_ref[sl, :] = jnp.sum(h1 * dec_w, axis=-1, keepdims=True) + dec_b

    hT_ref[0] = h0
    hT_ref[1] = h1


# --------------------------- parameter packing --------------------------------
def pack_params(params):
    """One-time host-side packing into two lane-aligned f32 slabs."""
    H = NHIDDEN

    def per_layer(w_ih, w_hh, b_ih, b_hh, in_dim):
        wih_t = w_ih.T                                   # (in_dim, 3H), gates r,z,n
        whh_t = w_hh.T                                   # (H, 3H)
        wih_pad = jnp.zeros((H, 3 * H), jnp.float32).at[:in_dim, :].set(wih_t)
        # Fold b_hh_r, b_hh_z into the input-projection bias; keep b_hh_n separate.
        b_in = b_ih.at[:2 * H].add(b_hh[:2 * H]).reshape(1, 3 * H)
        bhh_n = b_hh[2 * H:].reshape(1, H)
        return wih_pad, whh_t, b_in, bhh_n

    w0ih, w0hh, b0, bn0 = per_layer(*params["gru"][0], P)
    w1ih, w1hh, b1, bn1 = per_layer(*params["gru"][1], H)

    w_slab = jnp.stack([w0ih, w0hh, w1ih, w1hh], axis=0)          # (4, 32, 96)

    b_slab = jnp.zeros((4, 3 * H), jnp.float32)
    b_slab = b_slab.at[0].set(b0[0])
    b_slab = b_slab.at[1].set(b1[0])
    b_slab = b_slab.at[2, 0:H].set(bn0[0])
    b_slab = b_slab.at[2, H:2 * H].set(bn1[0])
    b_slab = b_slab.at[2, 2 * H:3 * H].set(params["dec_w"][0])    # Linear(H,1) weight row
    b_slab = b_slab.at[3, 0].set(params["dec_b"][0])
    return w_slab, b_slab


# ----------------------------- full forward -----------------------------------
@jax.jit
def rnn_forward(x_btp, hidden, w_slab, b_slab):
    """Mirrors Rnn.forward(input, hidden); Dropout(p=0) is identity.

    x_btp  : (B, T, P) batch_first input
    hidden : (num_layers, B, H)
    returns (out2 (B*T, 1), hout (num_layers, B, H))
    """
    bsz, seq, feat = x_btp.shape
    # Time-major rows (row = t*B + b), features zero-padded to H (matches padded W_ih0).
    x_tm = jnp.transpose(x_btp, (1, 0, 2)).reshape(seq * bsz, feat)
    x_pad = jnp.pad(x_tm, ((0, 0), (0, NHIDDEN - feat)))

    vmem = pl.BlockSpec(memory_space=pltpu.MemorySpace.VMEM)
    out_tm, hout = pl.pallas_call(
        fused_rnn_kernel,
        out_shape=(jax.ShapeDtypeStruct((seq * bsz, 1), jnp.float32),
                   jax.ShapeDtypeStruct((NUM_LAYERS, bsz, NHIDDEN), jnp.float32)),
        in_specs=[vmem, vmem, vmem, vmem],
        out_specs=(vmem, vmem),
    )(x_pad, hidden, w_slab, b_slab)

    # Time-major (T*B,1) -> batch-major (B*T,1), matching PyTorch ravel of (B,T,H).
    out2 = out_tm.reshape(seq, bsz).T.reshape(bsz * seq, 1)
    return out2, hout


# --------------------------- pure-JAX reference --------------------------------
def rnn_forward_ref(x_btp, hidden, params):
    x = jnp.transpose(x_btp, (1, 0, 2))
    layer_in = x
    h_finals = []
    for l in range(NUM_LAYERS):
        w_ih, w_hh, b_ih, b_hh = params["gru"][l]
        H = NHIDDEN
        h = hidden[l]
        outs = []
        for t in range(layer_in.shape[0]):
            gi = layer_in[t] @ w_ih.T + b_ih
            gh = h @ w_hh.T + b_hh
            r = jax.nn.sigmoid(gi[:, :H] + gh[:, :H])
            z = jax.nn.sigmoid(gi[:, H:2 * H] + gh[:, H:2 * H])
            n = jnp.tanh(gi[:, 2 * H:] + r * gh[:, 2 * H:])
            h = (1.0 - z) * n + z * h
            outs.append(h)
        layer_in = jnp.stack(outs, axis=0)
        h_finals.append(h)
    out1 = jnp.transpose(layer_in, (1, 0, 2))
    flat = out1.reshape(-1, NHIDDEN)
    out2 = flat @ params["dec_w"].T + params["dec_b"]
    return out2, jnp.stack(h_finals, axis=0)


# ----------------------------- parameter init ----------------------------------
def init_params(key):
    """Deterministic init matching the PyTorch module's parameter shapes."""
    H = NHIDDEN
    stdv = 1.0 / np.sqrt(H)
    params = {"gru": []}
    for l in range(NUM_LAYERS):
        in_l = P if l == 0 else H
        key, k1, k2, k3, k4 = jax.random.split(key, 5)
        w_ih = jax.random.uniform(k1, (3 * H, in_l), jnp.float32, -stdv, stdv)
        w_hh = jax.random.uniform(k2, (3 * H, H), jnp.float32, -stdv, stdv)
        b_ih = jax.random.uniform(k3, (3 * H,), jnp.float32, -stdv, stdv)
        b_hh = jax.random.uniform(k4, (3 * H,), jnp.float32, -stdv, stdv)
        params["gru"].append((w_ih, w_hh, b_ih, b_hh))
    key, kd = jax.random.split(key)
    params["dec_w"] = jax.random.uniform(kd, (1, H), jnp.float32, -0.1, 0.1)
    params["dec_b"] = jnp.zeros((1,), jnp.float32)
    return params


# ----------------------------- main ---------------------------------------------
if __name__ == "__main__":
    key = jax.random.PRNGKey(0)
    kp, kx = jax.random.split(key)
    params = init_params(kp)
    w_slab, b_slab = pack_params(params)   # one-time weight layout prep (outside jit path)

    x = jax.random.normal(kx, (B, T, P), jnp.float32)           # batch_first input
    hidden0 = jnp.zeros((NUM_LAYERS, B, NHIDDEN), jnp.float32)  # init_hidden(bsz)

    out2, hout = rnn_forward(x, hidden0, w_slab, b_slab)
    out2 = jax.block_until_ready(out2)
    hout = jax.block_until_ready(hout)

    ref_out2, ref_hout = rnn_forward_ref(x, hidden0, params)
    np.testing.assert_allclose(np.asarray(out2), np.asarray(ref_out2),
                               rtol=1e-4, atol=1e-4)
    np.testing.assert_allclose(np.asarray(hout), np.asarray(ref_hout),
                               rtol=1e-4, atol=1e-4)

    assert out2.shape == (B * T, 1)
    assert hout.shape == (NUM_LAYERS, B, NHIDDEN)
    print("KERNEL_OK")
</pallas_src>

<mosaic_0001>
module attributes {stable_mosaic.version = 11 : i64} {
  func.func @fused_rnn_kernel(%arg0: memref<16x32xf32, #tpu.memory_space<vmem>>, %arg1: memref<2x2x32xf32, #tpu.memory_space<vmem>>, %arg2: memref<4x32x96xf32, #tpu.memory_space<vmem>>, %arg3: memref<4x96xf32, #tpu.memory_space<vmem>>, %arg4: memref<16x1xf32, #tpu.memory_space<vmem>>, %arg5: memref<2x2x32xf32, #tpu.memory_space<vmem>>) attributes {dimension_semantics = [], scalar_prefetch = 0 : i64, scratch_operands = 0 : i64, tpu.core_type = #tpu.core_type<tc>} {
    %c0 = arith.constant 0 : index
    %c0_0 = arith.constant 0 : index
    %c0_1 = arith.constant 0 : index
    %0 = vector.load %arg2[%c0, %c0_0, %c0_1] : memref<4x32x96xf32, #tpu.memory_space<vmem>>, vector<1x32x96xf32>
    %1 = vector.shape_cast %0 : vector<1x32x96xf32> to vector<32x96xf32>
    %c1 = arith.constant 1 : index
    %c0_2 = arith.constant 0 : index
    %c0_3 = arith.constant 0 : index
    %2 = vector.load %arg2[%c1, %c0_2, %c0_3] : memref<4x32x96xf32, #tpu.memory_space<vmem>>, vector<1x32x96xf32>
    %3 = vector.shape_cast %2 : vector<1x32x96xf32> to vector<32x96xf32>
    %c2 = arith.constant 2 : index
    %c0_4 = arith.constant 0 : index
    %c0_5 = arith.constant 0 : index
    %4 = vector.load %arg2[%c2, %c0_4, %c0_5] : memref<4x32x96xf32, #tpu.memory_space<vmem>>, vector<1x32x96xf32>
    %5 = vector.shape_cast %4 : vector<1x32x96xf32> to vector<32x96xf32>
    %c3 = arith.constant 3 : index
    %c0_6 = arith.constant 0 : index
    %c0_7 = arith.constant 0 : index
    %6 = vector.load %arg2[%c3, %c0_6, %c0_7] : memref<4x32x96xf32, #tpu.memory_space<vmem>>, vector<1x32x96xf32>
    %7 = vector.shape_cast %6 : vector<1x32x96xf32> to vector<32x96xf32>
    %c0_8 = arith.constant 0 : index
    %c0_9 = arith.constant 0 : index
    %8 = vector.load %arg3[%c0_8, %c0_9] : memref<4x96xf32, #tpu.memory_space<vmem>>, vector<4x96xf32>
    %9 = vector.extract_strided_slice %8 {offsets = [0, 0], sizes = [1, 96], strides = [1, 1]} : vector<4x96xf32> to vector<1x96xf32>
    %10 = vector.extract_strided_slice %8 {offsets = [1, 0], sizes = [1, 96], strides = [1, 1]} : vector<4x96xf32> to vector<1x96xf32>
    %11 = vector.extract_strided_slice %8 {offsets = [2, 0], sizes = [1, 32], strides = [1, 1]} : vector<4x96xf32> to vector<1x32xf32>
    %12 = vector.extract_strided_slice %8 {offsets = [2, 32], sizes = [1, 32], strides = [1, 1]} : vector<4x96xf32> to vector<1x32xf32>
    %13 = vector.extract_strided_slice %8 {offsets = [2, 64], sizes = [1, 32], strides = [1, 1]} : vector<4x96xf32> to vector<1x32xf32>
    %14 = vector.extract_strided_slice %8 {offsets = [3, 0], sizes = [1, 1], strides = [1, 1]} : vector<4x96xf32> to vector<1x1xf32>
    %c0_10 = arith.constant 0 : index
    %c0_11 = arith.constant 0 : index
    %15 = vector.load %arg0[%c0_10, %c0_11] : memref<16x32xf32, #tpu.memory_space<vmem>>, vector<16x32xf32>
    %cst = arith.constant dense<0.000000e+00> : vector<16x96xf32>
    %16 = tpu.matmul %15, %1, %cst {dimension_numbers = #tpu.dot_dimension_numbers<[1], [0], [0], [1], [0, 0, 1, 1], [], []>} : vector<16x32xf32>, vector<32x96xf32>, vector<16x96xf32> -> vector<16x96xf32>
    %17 = vector.broadcast %9 : vector<1x96xf32> to vector<16x96xf32>
    %18 = arith.addf %16, %17 : vector<16x96xf32>
    %c0_12 = arith.constant 0 : index
    %c0_13 = arith.constant 0 : index
    %c0_14 = arith.constant 0 : index
    %19 = vector.load %arg1[%c0_12, %c0_13, %c0_14] : memref<2x2x32xf32, #tpu.memory_space<vmem>>, vector<1x2x32xf32>
    %20 = vector.shape_cast %19 : vector<1x2x32xf32> to vector<2x32xf32>
    %c1_15 = arith.constant 1 : index
    %c0_16 = arith.constant 0 : index
    %c0_17 = arith.constant 0 : index
    %21 = vector.load %arg1[%c1_15, %c0_16, %c0_17] : memref<2x2x32xf32, #tpu.memory_space<vmem>>, vector<1x2x32xf32>
    %22 = vector.shape_cast %21 : vector<1x2x32xf32> to vector<2x32xf32>
    %23 = vector.extract_strided_slice %18 {offsets = [0, 0], sizes = [2, 96], strides = [1, 1]} : vector<16x96xf32> to vector<2x96xf32>
    %cst_18 = arith.constant dense<0.000000e+00> : vector<2x96xf32>
    %24 = tpu.matmul %20, %3, %cst_18 {dimension_numbers = #tpu.dot_dimension_numbers<[1], [0], [0], [1], [0, 0, 1, 1], [], []>} : vector<2x32xf32>, vector<32x96xf32>, vector<2x96xf32> -> vector<2x96xf32>
    %25 = vector.extract_strided_slice %23 {offsets = [0, 0], sizes = [2, 32], strides = [1, 1]} : vector<2x96xf32> to vector<2x32xf32>
    %26 = vector.extract_strided_slice %24 {offsets = [0, 0], sizes = [2, 32], strides = [1, 1]} : vector<2x96xf32> to vector<2x32xf32>
    %27 = arith.addf %25, %26 : vector<2x32xf32>
    %28 = arith.negf %27 : vector<2x32xf32>
    %29 = math.exp %28 : vector<2x32xf32>
    %cst_19 = arith.constant 1.000000e+00 : f32
    %30 = vector.broadcast %cst_19 : f32 to vector<2x32xf32>
    %31 = arith.addf %30, %29 : vector<2x32xf32>
    %32 = arith.divf %30, %31 : vector<2x32xf32>
    %33 = vector.extract_strided_slice %23 {offsets = [0, 32], sizes = [2, 32], strides = [1, 1]} : vector<2x96xf32> to vector<2x32xf32>
    %34 = vector.extract_strided_slice %24 {offsets = [0, 32], sizes = [2, 32], strides = [1, 1]} : vector<2x96xf32> to vector<2x32xf32>
    %35 = arith.addf %33, %34 : vector<2x32xf32>
    %36 = arith.negf %35 : vector<2x32xf32>
    %37 = math.exp %36 : vector<2x32xf32>
    %cst_20 = arith.constant 1.000000e+00 : f32
    %38 = vector.broadcast %cst_20 : f32 to vector<2x32xf32>
    %39 = arith.addf %38, %37 : vector<2x32xf32>
    %40 = arith.divf %38, %39 : vector<2x32xf32>
    %41 = vector.extract_strided_slice %23 {offsets = [0, 64], sizes = [2, 32], strides = [1, 1]} : vector<2x96xf32> to vector<2x32xf32>
    %42 = vector.extract_strided_slice %24 {offsets = [0, 64], sizes = [2, 32], strides = [1, 1]} : vector<2x96xf32> to vector<2x32xf32>
    %43 = vector.broadcast %11 : vector<1x32xf32> to vector<2x32xf32>
    %44 = arith.addf %42, %43 : vector<2x32xf32>
    %45 = arith.mulf %32, %44 : vector<2x32xf32>
    %46 = arith.addf %41, %45 : vector<2x32xf32>
    %47 = math.tanh %46 : vector<2x32xf32>
    %cst_21 = arith.constant 1.000000e+00 : f32
    %48 = vector.broadcast %cst_21 : f32 to vector<2x32xf32>
    %49 = arith.subf %48, %40 : vector<2x32xf32>
    %50 = arith.mulf %49, %47 : vector<2x32xf32>
    %51 = arith.mulf %40, %20 : vector<2x32xf32>
    %52 = arith.addf %50, %51 : vector<2x32xf32>
    %cst_22 = arith.constant dense<0.000000e+00> : vector<2x96xf32>
    %53 = tpu.matmul %52, %5, %cst_22 {dimension_numbers = #tpu.dot_dimension_numbers<[1], [0], [0], [1], [0, 0, 1, 1], [], []>} : vector<2x32xf32>, vector<32x96xf32>, vector<2x96xf32> -> vector<2x96xf32>
    %54 = vector.broadcast %10 : vector<1x96xf32> to vector<2x96xf32>
    %55 = arith.addf %53, %54 : vector<2x96xf32>
    %cst_23 = arith.constant dense<0.000000e+00> : vector<2x96xf32>
    %56 = tpu.matmul %22, %7, %cst_23 {dimension_numbers = #tpu.dot_dimension_numbers<[1], [0], [0], [1], [0, 0, 1, 1], [], []>} : vector<2x32xf32>, vector<32x96xf32>, vector<2x96xf32> -> vector<2x96xf32>
    %57 = vector.extract_strided_slice %55 {offsets = [0, 0], sizes = [2, 32], strides = [1, 1]} : vector<2x96xf32> to vector<2x32xf32>
    %58 = vector.extract_strided_slice %56 {offsets = [0, 0], sizes = [2, 32], strides = [1, 1]} : vector<2x96xf32> to vector<2x32xf32>
    %59 = arith.addf %57, %58 : vector<2x32xf32>
    %60 = arith.negf %59 : vector<2x32xf32>
    %61 = math.exp %60 : vector<2x32xf32>
    %cst_24 = arith.constant 1.000000e+00 : f32
    %62 = vector.broadcast %cst_24 : f32 to vector<2x32xf32>
    %63 = arith.addf %62, %61 : vector<2x32xf32>
    %64 = arith.divf %62, %63 : vector<2x32xf32>
    %65 = vector.extract_strided_slice %55 {offsets = [0, 32], sizes = [2, 32], strides = [1, 1]} : vector<2x96xf32> to vector<2x32xf32>
    %66 = vector.extract_strided_slice %56 {offsets = [0, 32], sizes = [2, 32], strides = [1, 1]} : vector<2x96xf32> to vector<2x32xf32>
    %67 = arith.addf %65, %66 : vector<2x32xf32>
    %68 = arith.negf %67 : vector<2x32xf32>
    %69 = math.exp %68 : vector<2x32xf32>
    %cst_25 = arith.constant 1.000000e+00 : f32
    %70 = vector.broadcast %cst_25 : f32 to vector<2x32xf32>
    %71 = arith.addf %70, %69 : vector<2x32xf32>
    %72 = arith.divf %70, %71 : vector<2x32xf32>
    %73 = vector.extract_strided_slice %55 {offsets = [0, 64], sizes = [2, 32], strides = [1, 1]} : vector<2x96xf32> to vector<2x32xf32>
    %74 = vector.extract_strided_slice %56 {offsets = [0, 64], sizes = [2, 32], strides = [1, 1]} : vector<2x96xf32> to vector<2x32xf32>
    %75 = vector.broadcast %12 : vector<1x32xf32> to vector<2x32xf32>
    %76 = arith.addf %74, %75 : vector<2x32xf32>
    %77 = arith.mulf %64, %76 : vector<2x32xf32>
    %78 = arith.addf %73, %77 : vector<2x32xf32>
    %79 = math.tanh %78 : vector<2x32xf32>
    %cst_26 = arith.constant 1.000000e+00 : f32
    %80 = vector.broadcast %cst_26 : f32 to vector<2x32xf32>
    %81 = arith.subf %80, %72 : vector<2x32xf32>
    %82 = arith.mulf %81, %79 : vector<2x32xf32>
    %83 = arith.mulf %72, %22 : vector<2x32xf32>
    %84 = arith.addf %82, %83 : vector<2x32xf32>
    %85 = vector.broadcast %13 : vector<1x32xf32> to vector<2x32xf32>
    %86 = arith.mulf %84, %85 : vector<2x32xf32>
    %cst_27 = arith.constant dense<0.000000e+00> : vector<2xf32>
    %87 = vector.multi_reduction <add>, %86, %cst_27 [1] : vector<2x32xf32> to vector<2xf32>
    %88 = vector.shape_cast %87 : vector<2xf32> to vector<2x1xf32>
    %89 = vector.broadcast %14 : vector<1x1xf32> to vector<2x1xf32>
    %90 = arith.addf %88, %89 : vector<2x1xf32>
    %c0_28 = arith.constant 0 : index
    %c0_29 = arith.constant 0 : index
    %91 = vector.load %arg4[%c0_28, %c0_29] : memref<16x1xf32, #tpu.memory_space<vmem>>, vector<2x1xf32>
    tpu.vector_store %arg4[%c0_28, %c0_29], %90 {strides = array<i32>} : memref<16x1xf32, #tpu.memory_space<vmem>>, vector<2x1xf32>,
    %92 = vector.extract_strided_slice %18 {offsets = [2, 0], sizes = [2, 96], strides = [1, 1]} : vector<16x96xf32> to vector<2x96xf32>
    %cst_30 = arith.constant dense<0.000000e+00> : vector<2x96xf32>
    %93 = tpu.matmul %52, %3, %cst_30 {dimension_numbers = #tpu.dot_dimension_numbers<[1], [0], [0], [1], [0, 0, 1, 1], [], []>} : vector<2x32xf32>, vector<32x96xf32>, vector<2x96xf32> -> vector<2x96xf32>
    %94 = vector.extract_strided_slice %92 {offsets = [0, 0], sizes = [2, 32], strides = [1, 1]} : vector<2x96xf32> to vector<2x32xf32>
    %95 = vector.extract_strided_slice %93 {offsets = [0, 0], sizes = [2, 32], strides = [1, 1]} : vector<2x96xf32> to vector<2x32xf32>
    %96 = arith.addf %94, %95 : vector<2x32xf32>
    %97 = arith.negf %96 : vector<2x32xf32>
    %98 = math.exp %97 : vector<2x32xf32>
    %cst_31 = arith.constant 1.000000e+00 : f32
    %99 = vector.broadcast %cst_31 : f32 to vector<2x32xf32>
    %100 = arith.addf %99, %98 : vector<2x32xf32>
    %101 = arith.divf %99, %100 : vector<2x32xf32>
    %102 = vector.extract_strided_slice %92 {offsets = [0, 32], sizes = [2, 32], strides = [1, 1]} : vector<2x96xf32> to vector<2x32xf32>
    %103 = vector.extract_strided_slice %93 {offsets = [0, 32], sizes = [2, 32], strides = [1, 1]} : vector<2x96xf32> to vector<2x32xf32>
    %104 = arith.addf %102, %103 : vector<2x32xf32>
    %105 = arith.negf %104 : vector<2x32xf32>
    %106 = math.exp %105 : vector<2x32xf32>
    %cst_32 = arith.constant 1.000000e+00 : f32
    %107 = vector.broadcast %cst_32 : f32 to vector<2x32xf32>
    %108 = arith.addf %107, %106 : vector<2x32xf32>
    %109 = arith.divf %107, %108 : vector<2x32xf32>
    %110 = vector.extract_strided_slice %92 {offsets = [0, 64], sizes = [2, 32], strides = [1, 1]} : vector<2x96xf32> to vector<2x32xf32>
    %111 = vector.extract_strided_slice %93 {offsets = [0, 64], sizes = [2, 32], strides = [1, 1]} : vector<2x96xf32> to vector<2x32xf32>
    %112 = vector.broadcast %11 : vector<1x32xf32> to vector<2x32xf32>
    %113 = arith.addf %111, %112 : vector<2x32xf32>
    %114 = arith.mulf %101, %113 : vector<2x32xf32>
    %115 = arith.addf %110, %114 : vector<2x32xf32>
    %116 = math.tanh %115 : vector<2x32xf32>
    %cst_33 = arith.constant 1.000000e+00 : f32
    %117 = vector.broadcast %cst_33 : f32 to vector<2x32xf32>
    %118 = arith.subf %117, %109 : vector<2x32xf32>
    %119 = arith.mulf %118, %116 : vector<2x32xf32>
    %120 = arith.mulf %109, %52 : vector<2x32xf32>
    %121 = arith.addf %119, %120 : vector<2x32xf32>
    %cst_34 = arith.constant dense<0.000000e+00> : vector<2x96xf32>
    %122 = tpu.matmul %121, %5, %cst_34 {dimension_numbers = #tpu.dot_dimension_numbers<[1], [0], [0], [1], [0, 0, 1, 1], [], []>} : vector<2x32xf32>, vector<32x96xf32>, vector<2x96xf32> -> vector<2x96xf32>
    %123 = vector.broadcast %10 : vector<1x96xf32> to vector<2x96xf32>
    %124 = arith.addf %122, %123 : vector<2x96xf32>
    %cst_35 = arith.constant dense<0.000000e+00> : vector<2x96xf32>
    %125 = tpu.matmul %84, %7, %cst_35 {dimension_numbers = #tpu.dot_dimension_numbers<[1], [0], [0], [1], [0, 0, 1, 1], [], []>} : vector<2x32xf32>, vector<32x96xf32>, vector<2x96xf32> -> vector<2x96xf32>
    %126 = vector.extract_strided_slice %124 {offsets = [0, 0], sizes = [2, 32], strides = [1, 1]} : vector<2x96xf32> to vector<2x32xf32>
    %127 = vector.extract_strided_slice %125 {offsets = [0, 0], sizes = [2, 32], strides = [1, 1]} : vector<2x96xf32> to vector<2x32xf32>
    %128 = arith.addf %126, %127 : vector<2x32xf32>
    %129 = arith.negf %128 : vector<2x32xf32>
    %130 = math.exp %129 : vector<2x32xf32>
    %cst_36 = arith.constant 1.000000e+00 : f32
    %131 = vector.broadcast %cst_36 : f32 to vector<2x32xf32>
    %132 = arith.addf %131, %130 : vector<2x32xf32>
    %133 = arith.divf %131, %132 : vector<2x32xf32>
    %134 = vector.extract_strided_slice %124 {offsets = [0, 32], sizes = [2, 32], strides = [1, 1]} : vector<2x96xf32> to vector<2x32xf32>
    %135 = vector.extract_strided_slice %125 {offsets = [0, 32], sizes = [2, 32], strides = [1, 1]} : vector<2x96xf32> to vector<2x32xf32>
    %136 = arith.addf %134, %135 : vector<2x32xf32>
    %137 = arith.negf %136 : vector<2x32xf32>
    %138 = math.exp %137 : vector<2x32xf32>
    %cst_37 = arith.constant 1.000000e+00 : f32
    %139 = vector.broadcast %cst_37 : f32 to vector<2x32xf32>
    %140 = arith.addf %139, %138 : vector<2x32xf32>
    %141 = arith.divf %139, %140 : vector<2x32xf32>
    %142 = vector.extract_strided_slice %124 {offsets = [0, 64], sizes = [2, 32], strides = [1, 1]} : vector<2x96xf32> to vector<2x32xf32>
    %143 = vector.extract_strided_slice %125 {offsets = [0, 64], sizes = [2, 32], strides = [1, 1]} : vector<2x96xf32> to vector<2x32xf32>
    %144 = vector.broadcast %12 : vector<1x32xf32> to vector<2x32xf32>
    %145 = arith.addf %143, %144 : vector<2x32xf32>
    %146 = arith.mulf %133, %145 : vector<2x32xf32>
    %147 = arith.addf %142, %146 : vector<2x32xf32>
    %148 = math.tanh %147 : vector<2x32xf32>
    %cst_38 = arith.constant 1.000000e+00 : f32
    %149 = vector.broadcast %cst_38 : f32 to vector<2x32xf32>
    %150 = arith.subf %149, %141 : vector<2x32xf32>
    %151 = arith.mulf %150, %148 : vector<2x32xf32>
    %152 = arith.mulf %141, %84 : vector<2x32xf32>
    %153 = arith.addf %151, %152 : vector<2x32xf32>
    %154 = vector.broadcast %13 : vector<1x32xf32> to vector<2x32xf32>
    %155 = arith.mulf %153, %154 : vector<2x32xf32>
    %cst_39 = arith.constant dense<0.000000e+00> : vector<2xf32>
    %156 = vector.multi_reduction <add>, %155, %cst_39 [1] : vector<2x32xf32> to vector<2xf32>
    %157 = vector.shape_cast %156 : vector<2xf32> to vector<2x1xf32>
    %158 = vector.broadcast %14 : vector<1x1xf32> to vector<2x1xf32>
    %159 = arith.addf %157, %158 : vector<2x1xf32>
    %c2_40 = arith.constant 2 : index
    %c0_41 = arith.constant 0 : index
    %160 = vector.load %arg4[%c2_40, %c0_41] : memref<16x1xf32, #tpu.memory_space<vmem>>, vector<2x1xf32>
    tpu.vector_store %arg4[%c2_40, %c0_41], %159 {strides = array<i32>} : memref<16x1xf32, #tpu.memory_space<vmem>>, vector<2x1xf32>,
    %161 = vector.extract_strided_slice %18 {offsets = [4, 0], sizes = [2, 96], strides = [1, 1]} : vector<16x96xf32> to vector<2x96xf32>
    %cst_42 = arith.constant dense<0.000000e+00> : vector<2x96xf32>
    %162 = tpu.matmul %121, %3, %cst_42 {dimension_numbers = #tpu.dot_dimension_numbers<[1], [0], [0], [1], [0, 0, 1, 1], [], []>} : vector<2x32xf32>, vector<32x96xf32>, vector<2x96xf32> -> vector<2x96xf32>
    %163 = vector.extract_strided_slice %161 {offsets = [0, 0], sizes = [2, 32], strides = [1, 1]} : vector<2x96xf32> to vector<2x32xf32>
    %164 = vector.extract_strided_slice %162 {offsets = [0, 0], sizes = [2, 32], strides = [1, 1]} : vector<2x96xf32> to vector<2x32xf32>
    %165 = arith.addf %163, %164 : vector<2x32xf32>
    %166 = arith.negf %165 : vector<2x32xf32>
    %167 = math.exp %166 : vector<2x32xf32>
    %cst_43 = arith.constant 1.000000e+00 : f32
    %168 = vector.broadcast %cst_43 : f32 to vector<2x32xf32>
    %169 = arith.addf %168, %167 : vector<2x32xf32>
    %170 = arith.divf %168, %169 : vector<2x32xf32>
    %171 = vector.extract_strided_slice %161 {offsets = [0, 32], sizes = [2, 32], strides = [1, 1]} : vector<2x96xf32> to vector<2x32xf32>
    %172 = vector.extract_strided_slice %162 {offsets = [0, 32], sizes = [2, 32], strides = [1, 1]} : vector<2x96xf32> to vector<2x32xf32>
    %173 = arith.addf %171, %172 : vector<2x32xf32>
    %174 = arith.negf %173 : vector<2x32xf32>
    %175 = math.exp %174 : vector<2x32xf32>
    %cst_44 = arith.constant 1.000000e+00 : f32
    %176 = vector.broadcast %cst_44 : f32 to vector<2x32xf32>
    %177 = arith.addf %176, %175 : vector<2x32xf32>
    %178 = arith.divf %176, %177 : vector<2x32xf32>
    %179 = vector.extract_strided_slice %161 {offsets = [0, 64], sizes = [2, 32], strides = [1, 1]} : vector<2x96xf32> to vector<2x32xf32>
    %180 = vector.extract_strided_slice %162 {offsets = [0, 64], sizes = [2, 32], strides = [1, 1]} : vector<2x96xf32> to vector<2x32xf32>
    %181 = vector.broadcast %11 : vector<1x32xf32> to vector<2x32xf32>
    %182 = arith.addf %180, %181 : vector<2x32xf32>
    %183 = arith.mulf %170, %182 : vector<2x32xf32>
    %184 = arith.addf %179, %183 : vector<2x32xf32>
    %185 = math.tanh %184 : vector<2x32xf32>
    %cst_45 = arith.constant 1.000000e+00 : f32
    %186 = vector.broadcast %cst_45 : f32 to vector<2x32xf32>
    %187 = arith.subf %186, %178 : vector<2x32xf32>
    %188 = arith.mulf %187, %185 : vector<2x32xf32>
    %189 = arith.mulf %178, %121 : vector<2x32xf32>
    %190 = arith.addf %188, %189 : vector<2x32xf32>
    %cst_46 = arith.constant dense<0.000000e+00> : vector<2x96xf32>
    %191 = tpu.matmul %190, %5, %cst_46 {dimension_numbers = #tpu.dot_dimension_numbers<[1], [0], [0], [1], [0, 0, 1, 1], [], []>} : vector<2x32xf32>, vector<32x96xf32>, vector<2x96xf32> -> vector<2x96xf32>
    %192 = vector.broadcast %10 : vector<1x96xf32> to vector<2x96xf32>
    %193 = arith.addf %191, %192 : vector<2x96xf32>
    %cst_47 = arith.constant dense<0.000000e+00> : vector<2x96xf32>
    %194 = tpu.matmul %153, %7, %cst_47 {dimension_numbers = #tpu.dot_dimension_numbers<[1], [0], [0], [1], [0, 0, 1, 1], [], []>} : vector<2x32xf32>, vector<32x96xf32>, vector<2x96xf32> -> vector<2x96xf32>
    %195 = vector.extract_strided_slice %193 {offsets = [0, 0], sizes = [2, 32], strides = [1, 1]} : vector<2x96xf32> to vector<2x32xf32>
    %196 = vector.extract_strided_slice %194 {offsets = [0, 0], sizes = [2, 32], strides = [1, 1]} : vector<2x96xf32> to vector<2x32xf32>
    %197 = arith.addf %195, %196 : vector<2x32xf32>
    %198 = arith.negf %197 : vector<2x32xf32>
    %199 = math.exp %198 : vector<2x32xf32>
    %cst_48 = arith.constant 1.000000e+00 : f32
    %200 = vector.broadcast %cst_48 : f32 to vector<2x32xf32>
    %201 = arith.addf %200, %199 : vector<2x32xf32>
    %202 = arith.divf %200, %201 : vector<2x32xf32>
    %203 = vector.extract_strided_slice %193 {offsets = [0, 32], sizes = [2, 32], strides = [1, 1]} : vector<2x96xf32> to vector<2x32xf32>
    %204 = vector.extract_strided_slice %194 {offsets = [0, 32], sizes = [2, 32], strides = [1, 1]} : vector<2x96xf32> to vector<2x32xf32>
    %205 = arith.addf %203, %204 : vector<2x32xf32>
    %206 = arith.negf %205 : vector<2x32xf32>
    %207 = math.exp %206 : vector<2x32xf32>
    %cst_49 = arith.constant 1.000000e+00 : f32
    %208 = vector.broadcast %cst_49 : f32 to vector<2x32xf32>
    %209 = arith.addf %208, %207 : vector<2x32xf32>
    %210 = arith.divf %208, %209 : vector<2x32xf32>
    %211 = vector.extract_strided_slice %193 {offsets = [0, 64], sizes = [2, 32], strides = [1, 1]} : vector<2x96xf32> to vector<2x32xf32>
    %212 = vector.extract_strided_slice %194 {offsets = [0, 64], sizes = [2, 32], strides = [1, 1]} : vector<2x96xf32> to vector<2x32xf32>
    %213 = vector.broadcast %12 : vector<1x32xf32> to vector<2x32xf32>
    %214 = arith.addf %212, %213 : vector<2x32xf32>
    %215 = arith.mulf %202, %214 : vector<2x32xf32>
    %216 = arith.addf %211, %215 : vector<2x32xf32>
    %217 = math.tanh %216 : vector<2x32xf32>
    %cst_50 = arith.constant 1.000000e+00 : f32
    %218 = vector.broadcast %cst_50 : f32 to vector<2x32xf32>
    %219 = arith.subf %218, %210 : vector<2x32xf32>
    %220 = arith.mulf %219, %217 : vector<2x32xf32>
    %221 = arith.mulf %210, %153 : vector<2x32xf32>
    %222 = arith.addf %220, %221 : vector<2x32xf32>
    %223 = vector.broadcast %13 : vector<1x32xf32> to vector<2x32xf32>
    %224 = arith.mulf %222, %223 : vector<2x32xf32>
    %cst_51 = arith.constant dense<0.000000e+00> : vector<2xf32>
    %225 = vector.multi_reduction <add>, %224, %cst_51 [1] : vector<2x32xf32> to vector<2xf32>
    %226 = vector.shape_cast %225 : vector<2xf32> to vector<2x1xf32>
    %227 = vector.broadcast %14 : vector<1x1xf32> to vector<2x1xf32>
    %228 = arith.addf %226, %227 : vector<2x1xf32>
    %c4 = arith.constant 4 : index
    %c0_52 = arith.constant 0 : index
    %229 = vector.load %arg4[%c4, %c0_52] : memref<16x1xf32, #tpu.memory_space<vmem>>, vector<2x1xf32>
    tpu.vector_store %arg4[%c4, %c0_52], %228 {strides = array<i32>} : memref<16x1xf32, #tpu.memory_space<vmem>>, vector<2x1xf32>,
    %230 = vector.extract_strided_slice %18 {offsets = [6, 0], sizes = [2, 96], strides = [1, 1]} : vector<16x96xf32> to vector<2x96xf32>
    %cst_53 = arith.constant dense<0.000000e+00> : vector<2x96xf32>
    %231 = tpu.matmul %190, %3, %cst_53 {dimension_numbers = #tpu.dot_dimension_numbers<[1], [0], [0], [1], [0, 0, 1, 1], [], []>} : vector<2x32xf32>, vector<32x96xf32>, vector<2x96xf32> -> vector<2x96xf32>
    %232 = vector.extract_strided_slice %230 {offsets = [0, 0], sizes = [2, 32], strides = [1, 1]} : vector<2x96xf32> to vector<2x32xf32>
    %233 = vector.extract_strided_slice %231 {offsets = [0, 0], sizes = [2, 32], strides = [1, 1]} : vector<2x96xf32> to vector<2x32xf32>
    %234 = arith.addf %232, %233 : vector<2x32xf32>
    %235 = arith.negf %234 : vector<2x32xf32>
    %236 = math.exp %235 : vector<2x32xf32>
    %cst_54 = arith.constant 1.000000e+00 : f32
    %237 = vector.broadcast %cst_54 : f32 to vector<2x32xf32>
    %238 = arith.addf %237, %236 : vector<2x32xf32>
    %239 = arith.divf %237, %238 : vector<2x32xf32>
    %240 = vector.extract_strided_slice %230 {offsets = [0, 32], sizes = [2, 32], strides = [1, 1]} : vector<2x96xf32> to vector<2x32xf32>
    %241 = vector.extract_strided_slice %231 {offsets = [0, 32], sizes = [2, 32], strides = [1, 1]} : vector<2x96xf32> to vector<2x32xf32>
    %242 = arith.addf %240, %241 : vector<2x32xf32>
    %243 = arith.negf %242 : vector<2x32xf32>
    %244 = math.exp %243 : vector<2x32xf32>
    %cst_55 = arith.constant 1.000000e+00 : f32
    %245 = vector.broadcast %cst_55 : f32 to vector<2x32xf32>
    %246 = arith.addf %245, %244 : vector<2x32xf32>
    %247 = arith.divf %245, %246 : vector<2x32xf32>
    %248 = vector.extract_strided_slice %230 {offsets = [0, 64], sizes = [2, 32], strides = [1, 1]} : vector<2x96xf32> to vector<2x32xf32>
    %249 = vector.extract_strided_slice %231 {offsets = [0, 64], sizes = [2, 32], strides = [1, 1]} : vector<2x96xf32> to vector<2x32xf32>
    %250 = vector.broadcast %11 : vector<1x32xf32> to vector<2x32xf32>
    %251 = arith.addf %249, %250 : vector<2x32xf32>
    %252 = arith.mulf %239, %251 : vector<2x32xf32>
    %253 = arith.addf %248, %252 : vector<2x32xf32>
    %254 = math.tanh %253 : vector<2x32xf32>
    %cst_56 = arith.constant 1.000000e+00 : f32
    %255 = vector.broadcast %cst_56 : f32 to vector<2x32xf32>
    %256 = arith.subf %255, %247 : vector<2x32xf32>
    %257 = arith.mulf %256, %254 : vector<2x32xf32>
    %258 = arith.mulf %247, %190 : vector<2x32xf32>
    %259 = arith.addf %257, %258 : vector<2x32xf32>
    %cst_57 = arith.constant dense<0.000000e+00> : vector<2x96xf32>
    %260 = tpu.matmul %259, %5, %cst_57 {dimension_numbers = #tpu.dot_dimension_numbers<[1], [0], [0], [1], [0, 0, 1, 1], [], []>} : vector<2x32xf32>, vector<32x96xf32>, vector<2x96xf32> -> vector<2x96xf32>
    %261 = vector.broadcast %10 : vector<1x96xf32> to vector<2x96xf32>
    %262 = arith.addf %260, %261 : vector<2x96xf32>
    %cst_58 = arith.constant dense<0.000000e+00> : vector<2x96xf32>
    %263 = tpu.matmul %222, %7, %cst_58 {dimension_numbers = #tpu.dot_dimension_numbers<[1], [0], [0], [1], [0, 0, 1, 1], [], []>} : vector<2x32xf32>, vector<32x96xf32>, vector<2x96xf32> -> vector<2x96xf32>
    %264 = vector.extract_strided_slice %262 {offsets = [0, 0], sizes = [2, 32], strides = [1, 1]} : vector<2x96xf32> to vector<2x32xf32>
    %265 = vector.extract_strided_slice %263 {offsets = [0, 0], sizes = [2, 32], strides = [1, 1]} : vector<2x96xf32> to vector<2x32xf32>
    %266 = arith.addf %264, %265 : vector<2x32xf32>
    %267 = arith.negf %266 : vector<2x32xf32>
    %268 = math.exp %267 : vector<2x32xf32>
    %cst_59 = arith.constant 1.000000e+00 : f32
    %269 = vector.broadcast %cst_59 : f32 to vector<2x32xf32>
    %270 = arith.addf %269, %268 : vector<2x32xf32>
    %271 = arith.divf %269, %270 : vector<2x32xf32>
    %272 = vector.extract_strided_slice %262 {offsets = [0, 32], sizes = [2, 32], strides = [1, 1]} : vector<2x96xf32> to vector<2x32xf32>
    %273 = vector.extract_strided_slice %263 {offsets = [0, 32], sizes = [2, 32], strides = [1, 1]} : vector<2x96xf32> to vector<2x32xf32>
    %274 = arith.addf %272, %273 : vector<2x32xf32>
    %275 = arith.negf %274 : vector<2x32xf32>
    %276 = math.exp %275 : vector<2x32xf32>
    %cst_60 = arith.constant 1.000000e+00 : f32
    %277 = vector.broadcast %cst_60 : f32 to vector<2x32xf32>
    %278 = arith.addf %277, %276 : vector<2x32xf32>
    %279 = arith.divf %277, %278 : vector<2x32xf32>
    %280 = vector.extract_strided_slice %262 {offsets = [0, 64], sizes = [2, 32], strides = [1, 1]} : vector<2x96xf32> to vector<2x32xf32>
    %281 = vector.extract_strided_slice %263 {offsets = [0, 64], sizes = [2, 32], strides = [1, 1]} : vector<2x96xf32> to vector<2x32xf32>
    %282 = vector.broadcast %12 : vector<1x32xf32> to vector<2x32xf32>
    %283 = arith.addf %281, %282 : vector<2x32xf32>
    %284 = arith.mulf %271, %283 : vector<2x32xf32>
    %285 = arith.addf %280, %284 : vector<2x32xf32>
    %286 = math.tanh %285 : vector<2x32xf32>
    %cst_61 = arith.constant 1.000000e+00 : f32
    %287 = vector.broadcast %cst_61 : f32 to vector<2x32xf32>
    %288 = arith.subf %287, %279 : vector<2x32xf32>
    %289 = arith.mulf %288, %286 : vector<2x32xf32>
    %290 = arith.mulf %279, %222 : vector<2x32xf32>
    %291 = arith.addf %289, %290 : vector<2x32xf32>
    %292 = vector.broadcast %13 : vector<1x32xf32> to vector<2x32xf32>
    %293 = arith.mulf %291, %292 : vector<2x32xf32>
    %cst_62 = arith.constant dense<0.000000e+00> : vector<2xf32>
    %294 = vector.multi_reduction <add>, %293, %cst_62 [1] : vector<2x32xf32> to vector<2xf32>
    %295 = vector.shape_cast %294 : vector<2xf32> to vector<2x1xf32>
    %296 = vector.broadcast %14 : vector<1x1xf32> to vector<2x1xf32>
    %297 = arith.addf %295, %296 : vector<2x1xf32>
    %c6 = arith.constant 6 : index
    %c0_63 = arith.constant 0 : index
    %298 = vector.load %arg4[%c6, %c0_63] : memref<16x1xf32, #tpu.memory_space<vmem>>, vector<2x1xf32>
    tpu.vector_store %arg4[%c6, %c0_63], %297 {strides = array<i32>} : memref<16x1xf32, #tpu.memory_space<vmem>>, vector<2x1xf32>,
    %299 = vector.extract_strided_slice %18 {offsets = [8, 0], sizes = [2, 96], strides = [1, 1]} : vector<16x96xf32> to vector<2x96xf32>
    %cst_64 = arith.constant dense<0.000000e+00> : vector<2x96xf32>
    %300 = tpu.matmul %259, %3, %cst_64 {dimension_numbers = #tpu.dot_dimension_numbers<[1], [0], [0], [1], [0, 0, 1, 1], [], []>} : vector<2x32xf32>, vector<32x96xf32>, vector<2x96xf32> -> vector<2x96xf32>
    %301 = vector.extract_strided_slice %299 {offsets = [0, 0], sizes = [2, 32], strides = [1, 1]} : vector<2x96xf32> to vector<2x32xf32>
    %302 = vector.extract_strided_slice %300 {offsets = [0, 0], sizes = [2, 32], strides = [1, 1]} : vector<2x96xf32> to vector<2x32xf32>
    %303 = arith.addf %301, %302 : vector<2x32xf32>
    %304 = arith.negf %303 : vector<2x32xf32>
    %305 = math.exp %304 : vector<2x32xf32>
    %cst_65 = arith.constant 1.000000e+00 : f32
    %306 = vector.broadcast %cst_65 : f32 to vector<2x32xf32>
    %307 = arith.addf %306, %305 : vector<2x32xf32>
    %308 = arith.divf %306, %307 : vector<2x32xf32>
    %309 = vector.extract_strided_slice %299 {offsets = [0, 32], sizes = [2, 32], strides = [1, 1]} : vector<2x96xf32> to vector<2x32xf32>
    %310 = vector.extract_strided_slice %300 {offsets = [0, 32], sizes = [2, 32], strides = [1, 1]} : vector<2x96xf32> to vector<2x32xf32>
    %311 = arith.addf %309, %310 : vector<2x32xf32>
    %312 = arith.negf %311 : vector<2x32xf32>
    %313 = math.exp %312 : vector<2x32xf32>
    %cst_66 = arith.constant 1.000000e+00 : f32
    %314 = vector.broadcast %cst_66 : f32 to vector<2x32xf32>
    %315 = arith.addf %314, %313 : vector<2x32xf32>
    %316 = arith.divf %314, %315 : vector<2x32xf32>
    %317 = vector.extract_strided_slice %299 {offsets = [0, 64], sizes = [2, 32], strides = [1, 1]} : vector<2x96xf32> to vector<2x32xf32>
    %318 = vector.extract_strided_slice %300 {offsets = [0, 64], sizes = [2, 32], strides = [1, 1]} : vector<2x96xf32> to vector<2x32xf32>
    %319 = vector.broadcast %11 : vector<1x32xf32> to vector<2x32xf32>
    %320 = arith.addf %318, %319 : vector<2x32xf32>
    %321 = arith.mulf %308, %320 : vector<2x32xf32>
    %322 = arith.addf %317, %321 : vector<2x32xf32>
    %323 = math.tanh %322 : vector<2x32xf32>
    %cst_67 = arith.constant 1.000000e+00 : f32
    %324 = vector.broadcast %cst_67 : f32 to vector<2x32xf32>
    %325 = arith.subf %324, %316 : vector<2x32xf32>
    %326 = arith.mulf %325, %323 : vector<2x32xf32>
    %327 = arith.mulf %316, %259 : vector<2x32xf32>
    %328 = arith.addf %326, %327 : vector<2x32xf32>
    %cst_68 = arith.constant dense<0.000000e+00> : vector<2x96xf32>
    %329 = tpu.matmul %328, %5, %cst_68 {dimension_numbers = #tpu.dot_dimension_numbers<[1], [0], [0], [1], [0, 0, 1, 1], [], []>} : vector<2x32xf32>, vector<32x96xf32>, vector<2x96xf32> -> vector<2x96xf32>
    %330 = vector.broadcast %10 : vector<1x96xf32> to vector<2x96xf32>
    %331 = arith.addf %329, %330 : vector<2x96xf32>
    %cst_69 = arith.constant dense<0.000000e+00> : vector<2x96xf32>
    %332 = tpu.matmul %291, %7, %cst_69 {dimension_numbers = #tpu.dot_dimension_numbers<[1], [0], [0], [1], [0, 0, 1, 1], [], []>} : vector<2x32xf32>, vector<32x96xf32>, vector<2x96xf32> -> vector<2x96xf32>
    %333 = vector.extract_strided_slice %331 {offsets = [0, 0], sizes = [2, 32], strides = [1, 1]} : vector<2x96xf32> to vector<2x32xf32>
    %334 = vector.extract_strided_slice %332 {offsets = [0, 0], sizes = [2, 32], strides = [1, 1]} : vector<2x96xf32> to vector<2x32xf32>
    %335 = arith.addf %333, %334 : vector<2x32xf32>
    %336 = arith.negf %335 : vector<2x32xf32>
    %337 = math.exp %336 : vector<2x32xf32>
    %cst_70 = arith.constant 1.000000e+00 : f32
    %338 = vector.broadcast %cst_70 : f32 to vector<2x32xf32>
    %339 = arith.addf %338, %337 : vector<2x32xf32>
    %340 = arith.divf %338, %339 : vector<2x32xf32>
    %341 = vector.extract_strided_slice %331 {offsets = [0, 32], sizes = [2, 32], strides = [1, 1]} : vector<2x96xf32> to vector<2x32xf32>
    %342 = vector.extract_strided_slice %332 {offsets = [0, 32], sizes = [2, 32], strides = [1, 1]} : vector<2x96xf32> to vector<2x32xf32>
    %343 = arith.addf %341, %342 : vector<2x32xf32>
    %344 = arith.negf %343 : vector<2x32xf32>
    %345 = math.exp %344 : vector<2x32xf32>
    %cst_71 = arith.constant 1.000000e+00 : f32
    %346 = vector.broadcast %cst_71 : f32 to vector<2x32xf32>
    %347 = arith.addf %346, %345 : vector<2x32xf32>
    %348 = arith.divf %346, %347 : vector<2x32xf32>
    %349 = vector.extract_strided_slice %331 {offsets = [0, 64], sizes = [2, 32], strides = [1, 1]} : vector<2x96xf32> to vector<2x32xf32>
    %350 = vector.extract_strided_slice %332 {offsets = [0, 64], sizes = [2, 32], strides = [1, 1]} : vector<2x96xf32> to vector<2x32xf32>
    %351 = vector.broadcast %12 : vector<1x32xf32> to vector<2x32xf32>
    %352 = arith.addf %350, %351 : vector<2x32xf32>
    %353 = arith.mulf %340, %352 : vector<2x32xf32>
    %354 = arith.addf %349, %353 : vector<2x32xf32>
    %355 = math.tanh %354 : vector<2x32xf32>
    %cst_72 = arith.constant 1.000000e+00 : f32
    %356 = vector.broadcast %cst_72 : f32 to vector<2x32xf32>
    %357 = arith.subf %356, %348 : vector<2x32xf32>
    %358 = arith.mulf %357, %355 : vector<2x32xf32>
    %359 = arith.mulf %348, %291 : vector<2x32xf32>
    %360 = arith.addf %358, %359 : vector<2x32xf32>
    %361 = vector.broadcast %13 : vector<1x32xf32> to vector<2x32xf32>
    %362 = arith.mulf %360, %361 : vector<2x32xf32>
    %cst_73 = arith.constant dense<0.000000e+00> : vector<2xf32>
    %363 = vector.multi_reduction <add>, %362, %cst_73 [1] : vector<2x32xf32> to vector<2xf32>
    %364 = vector.shape_cast %363 : vector<2xf32> to vector<2x1xf32>
    %365 = vector.broadcast %14 : vector<1x1xf32> to vector<2x1xf32>
    %366 = arith.addf %364, %365 : vector<2x1xf32>
    %c8 = arith.constant 8 : index
    %c0_74 = arith.constant 0 : index
    %367 = vector.load %arg4[%c8, %c0_74] : memref<16x1xf32, #tpu.memory_space<vmem>>, vector<2x1xf32>
    tpu.vector_store %arg4[%c8, %c0_74], %366 {strides = array<i32>} : memref<16x1xf32, #tpu.memory_space<vmem>>, vector<2x1xf32>,
    %368 = vector.extract_strided_slice %18 {offsets = [10, 0], sizes = [2, 96], strides = [1, 1]} : vector<16x96xf32> to vector<2x96xf32>
    %cst_75 = arith.constant dense<0.000000e+00> : vector<2x96xf32>
    %369 = tpu.matmul %328, %3, %cst_75 {dimension_numbers = #tpu.dot_dimension_numbers<[1], [0], [0], [1], [0, 0, 1, 1], [], []>} : vector<2x32xf32>, vector<32x96xf32>, vector<2x96xf32> -> vector<2x96xf32>
    %370 = vector.extract_strided_slice %368 {offsets = [0, 0], sizes = [2, 32], strides = [1, 1]} : vector<2x96xf32> to vector<2x32xf32>
    %371 = vector.extract_strided_slice %369 {offsets = [0, 0], sizes = [2, 32], strides = [1, 1]} : vector<2x96xf32> to vector<2x32xf32>
    %372 = arith.addf %370, %371 : vector<2x32xf32>
    %373 = arith.negf %372 : vector<2x32xf32>
    %374 = math.exp %373 : vector<2x32xf32>
    %cst_76 = arith.constant 1.000000e+00 : f32
    %375 = vector.broadcast %cst_76 : f32 to vector<2x32xf32>
    %376 = arith.addf %375, %374 : vector<2x32xf32>
    %377 = arith.divf %375, %376 : vector<2x32xf32>
    %378 = vector.extract_strided_slice %368 {offsets = [0, 32], sizes = [2, 32], strides = [1, 1]} : vector<2x96xf32> to vector<2x32xf32>
    %379 = vector.extract_strided_slice %369 {offsets = [0, 32], sizes = [2, 32], strides = [1, 1]} : vector<2x96xf32> to vector<2x32xf32>
    %380 = arith.addf %378, %379 : vector<2x32xf32>
    %381 = arith.negf %380 : vector<2x32xf32>
    %382 = math.exp %381 : vector<2x32xf32>
    %cst_77 = arith.constant 1.000000e+00 : f32
    %383 = vector.broadcast %cst_77 : f32 to vector<2x32xf32>
    %384 = arith.addf %383, %382 : vector<2x32xf32>
    %385 = arith.divf %383, %384 : vector<2x32xf32>
    %386 = vector.extract_strided_slice %368 {offsets = [0, 64], sizes = [2, 32], strides = [1, 1]} : vector<2x96xf32> to vector<2x32xf32>
    %387 = vector.extract_strided_slice %369 {offsets = [0, 64], sizes = [2, 32], strides = [1, 1]} : vector<2x96xf32> to vector<2x32xf32>
    %388 = vector.broadcast %11 : vector<1x32xf32> to vector<2x32xf32>
    %389 = arith.addf %387, %388 : vector<2x32xf32>
    %390 = arith.mulf %377, %389 : vector<2x32xf32>
    %391 = arith.addf %386, %390 : vector<2x32xf32>
    %392 = math.tanh %391 : vector<2x32xf32>
    %cst_78 = arith.constant 1.000000e+00 : f32
    %393 = vector.broadcast %cst_78 : f32 to vector<2x32xf32>
    %394 = arith.subf %393, %385 : vector<2x32xf32>
    %395 = arith.mulf %394, %392 : vector<2x32xf32>
    %396 = arith.mulf %385, %328 : vector<2x32xf32>
    %397 = arith.addf %395, %396 : vector<2x32xf32>
    %cst_79 = arith.constant dense<0.000000e+00> : vector<2x96xf32>
    %398 = tpu.matmul %397, %5, %cst_79 {dimension_numbers = #tpu.dot_dimension_numbers<[1], [0], [0], [1], [0, 0, 1, 1], [], []>} : vector<2x32xf32>, vector<32x96xf32>, vector<2x96xf32> -> vector<2x96xf32>
    %399 = vector.broadcast %10 : vector<1x96xf32> to vector<2x96xf32>
    %400 = arith.addf %398, %399 : vector<2x96xf32>
    %cst_80 = arith.constant dense<0.000000e+00> : vector<2x96xf32>
    %401 = tpu.matmul %360, %7, %cst_80 {dimension_numbers = #tpu.dot_dimension_numbers<[1], [0], [0], [1], [0, 0, 1, 1], [], []>} : vector<2x32xf32>, vector<32x96xf32>, vector<2x96xf32> -> vector<2x96xf32>
    %402 = vector.extract_strided_slice %400 {offsets = [0, 0], sizes = [2, 32], strides = [1, 1]} : vector<2x96xf32> to vector<2x32xf32>
    %403 = vector.extract_strided_slice %401 {offsets = [0, 0], sizes = [2, 32], strides = [1, 1]} : vector<2x96xf32> to vector<2x32xf32>
    %404 = arith.addf %402, %403 : vector<2x32xf32>
    %405 = arith.negf %404 : vector<2x32xf32>
    %406 = math.exp %405 : vector<2x32xf32>
    %cst_81 = arith.constant 1.000000e+00 : f32
    %407 = vector.broadcast %cst_81 : f32 to vector<2x32xf32>
    %408 = arith.addf %407, %406 : vector<2x32xf32>
    %409 = arith.divf %407, %408 : vector<2x32xf32>
    %410 = vector.extract_strided_slice %400 {offsets = [0, 32], sizes = [2, 32], strides = [1, 1]} : vector<2x96xf32> to vector<2x32xf32>
    %411 = vector.extract_strided_slice %401 {offsets = [0, 32], sizes = [2, 32], strides = [1, 1]} : vector<2x96xf32> to vector<2x32xf32>
    %412 = arith.addf %410, %411 : vector<2x32xf32>
    %413 = arith.negf %412 : vector<2x32xf32>
    %414 = math.exp %413 : vector<2x32xf32>
    %cst_82 = arith.constant 1.000000e+00 : f32
    %415 = vector.broadcast %cst_82 : f32 to vector<2x32xf32>
    %416 = arith.addf %415, %414 : vector<2x32xf32>
    %417 = arith.divf %415, %416 : vector<2x32xf32>
    %418 = vector.extract_strided_slice %400 {offsets = [0, 64], sizes = [2, 32], strides = [1, 1]} : vector<2x96xf32> to vector<2x32xf32>
    %419 = vector.extract_strided_slice %401 {offsets = [0, 64], sizes = [2, 32], strides = [1, 1]} : vector<2x96xf32> to vector<2x32xf32>
    %420 = vector.broadcast %12 : vector<1x32xf32> to vector<2x32xf32>
    %421 = arith.addf %419, %420 : vector<2x32xf32>
    %422 = arith.mulf %409, %421 : vector<2x32xf32>
    %423 = arith.addf %418, %422 : vector<2x32xf32>
    %424 = math.tanh %423 : vector<2x32xf32>
    %cst_83 = arith.constant 1.000000e+00 : f32
    %425 = vector.broadcast %cst_83 : f32 to vector<2x32xf32>
    %426 = arith.subf %425, %417 : vector<2x32xf32>
    %427 = arith.mulf %426, %424 : vector<2x32xf32>
    %428 = arith.mulf %417, %360 : vector<2x32xf32>
    %429 = arith.addf %427, %428 : vector<2x32xf32>
    %430 = vector.broadcast %13 : vector<1x32xf32> to vector<2x32xf32>
    %431 = arith.mulf %429, %430 : vector<2x32xf32>
    %cst_84 = arith.constant dense<0.000000e+00> : vector<2xf32>
    %432 = vector.multi_reduction <add>, %431, %cst_84 [1] : vector<2x32xf32> to vector<2xf32>
    %433 = vector.shape_cast %432 : vector<2xf32> to vector<2x1xf32>
    %434 = vector.broadcast %14 : vector<1x1xf32> to vector<2x1xf32>
    %435 = arith.addf %433, %434 : vector<2x1xf32>
    %c10 = arith.constant 10 : index
    %c0_85 = arith.constant 0 : index
    %436 = vector.load %arg4[%c10, %c0_85] : memref<16x1xf32, #tpu.memory_space<vmem>>, vector<2x1xf32>
    tpu.vector_store %arg4[%c10, %c0_85], %435 {strides = array<i32>} : memref<16x1xf32, #tpu.memory_space<vmem>>, vector<2x1xf32>,
    %437 = vector.extract_strided_slice %18 {offsets = [12, 0], sizes = [2, 96], strides = [1, 1]} : vector<16x96xf32> to vector<2x96xf32>
    %cst_86 = arith.constant dense<0.000000e+00> : vector<2x96xf32>
    %438 = tpu.matmul %397, %3, %cst_86 {dimension_numbers = #tpu.dot_dimension_numbers<[1], [0], [0], [1], [0, 0, 1, 1], [], []>} : vector<2x32xf32>, vector<32x96xf32>, vector<2x96xf32> -> vector<2x96xf32>
    %439 = vector.extract_strided_slice %437 {offsets = [0, 0], sizes = [2, 32], strides = [1, 1]} : vector<2x96xf32> to vector<2x32xf32>
    %440 = vector.extract_strided_slice %438 {offsets = [0, 0], sizes = [2, 32], strides = [1, 1]} : vector<2x96xf32> to vector<2x32xf32>
    %441 = arith.addf %439, %440 : vector<2x32xf32>
    %442 = arith.negf %441 : vector<2x32xf32>
    %443 = math.exp %442 : vector<2x32xf32>
    %cst_87 = arith.constant 1.000000e+00 : f32
    %444 = vector.broadcast %cst_87 : f32 to vector<2x32xf32>
    %445 = arith.addf %444, %443 : vector<2x32xf32>
    %446 = arith.divf %444, %445 : vector<2x32xf32>
    %447 = vector.extract_strided_slice %437 {offsets = [0, 32], sizes = [2, 32], strides = [1, 1]} : vector<2x96xf32> to vector<2x32xf32>
    %448 = vector.extract_strided_slice %438 {offsets = [0, 32], sizes = [2, 32], strides = [1, 1]} : vector<2x96xf32> to vector<2x32xf32>
    %449 = arith.addf %447, %448 : vector<2x32xf32>
    %450 = arith.negf %449 : vector<2x32xf32>
    %451 = math.exp %450 : vector<2x32xf32>
    %cst_88 = arith.constant 1.000000e+00 : f32
    %452 = vector.broadcast %cst_88 : f32 to vector<2x32xf32>
    %453 = arith.addf %452, %451 : vector<2x32xf32>
    %454 = arith.divf %452, %453 : vector<2x32xf32>
    %455 = vector.extract_strided_slice %437 {offsets = [0, 64], sizes = [2, 32], strides = [1, 1]} : vector<2x96xf32> to vector<2x32xf32>
    %456 = vector.extract_strided_slice %438 {offsets = [0, 64], sizes = [2, 32], strides = [1, 1]} : vector<2x96xf32> to vector<2x32xf32>
    %457 = vector.broadcast %11 : vector<1x32xf32> to vector<2x32xf32>
    %458 = arith.addf %456, %457 : vector<2x32xf32>
    %459 = arith.mulf %446, %458 : vector<2x32xf32>
    %460 = arith.addf %455, %459 : vector<2x32xf32>
    %461 = math.tanh %460 : vector<2x32xf32>
    %cst_89 = arith.constant 1.000000e+00 : f32
    %462 = vector.broadcast %cst_89 : f32 to vector<2x32xf32>
    %463 = arith.subf %462, %454 : vector<2x32xf32>
    %464 = arith.mulf %463, %461 : vector<2x32xf32>
    %465 = arith.mulf %454, %397 : vector<2x32xf32>
    %466 = arith.addf %464, %465 : vector<2x32xf32>
    %cst_90 = arith.constant dense<0.000000e+00> : vector<2x96xf32>
    %467 = tpu.matmul %466, %5, %cst_90 {dimension_numbers = #tpu.dot_dimension_numbers<[1], [0], [0], [1], [0, 0, 1, 1], [], []>} : vector<2x32xf32>, vector<32x96xf32>, vector<2x96xf32> -> vector<2x96xf32>
    %468 = vector.broadcast %10 : vector<1x96xf32> to vector<2x96xf32>
    %469 = arith.addf %467, %468 : vector<2x96xf32>
    %cst_91 = arith.constant dense<0.000000e+00> : vector<2x96xf32>
    %470 = tpu.matmul %429, %7, %cst_91 {dimension_numbers = #tpu.dot_dimension_numbers<[1], [0], [0], [1], [0, 0, 1, 1], [], []>} : vector<2x32xf32>, vector<32x96xf32>, vector<2x96xf32> -> vector<2x96xf32>
    %471 = vector.extract_strided_slice %469 {offsets = [0, 0], sizes = [2, 32], strides = [1, 1]} : vector<2x96xf32> to vector<2x32xf32>
    %472 = vector.extract_strided_slice %470 {offsets = [0, 0], sizes = [2, 32], strides = [1, 1]} : vector<2x96xf32> to vector<2x32xf32>
    %473 = arith.addf %471, %472 : vector<2x32xf32>
    %474 = arith.negf %473 : vector<2x32xf32>
    %475 = math.exp %474 : vector<2x32xf32>
    %cst_92 = arith.constant 1.000000e+00 : f32
    %476 = vector.broadcast %cst_92 : f32 to vector<2x32xf32>
    %477 = arith.addf %476, %475 : vector<2x32xf32>
    %478 = arith.divf %476, %477 : vector<2x32xf32>
    %479 = vector.extract_strided_slice %469 {offsets = [0, 32], sizes = [2, 32], strides = [1, 1]} : vector<2x96xf32> to vector<2x32xf32>
    %480 = vector.extract_strided_slice %470 {offsets = [0, 32], sizes = [2, 32], strides = [1, 1]} : vector<2x96xf32> to vector<2x32xf32>
    %481 = arith.addf %479, %480 : vector<2x32xf32>
    %482 = arith.negf %481 : vector<2x32xf32>
    %483 = math.exp %482 : vector<2x32xf32>
    %cst_93 = arith.constant 1.000000e+00 : f32
    %484 = vector.broadcast %cst_93 : f32 to vector<2x32xf32>
    %485 = arith.addf %484, %483 : vector<2x32xf32>
    %486 = arith.divf %484, %485 : vector<2x32xf32>
    %487 = vector.extract_strided_slice %469 {offsets = [0, 64], sizes = [2, 32], strides = [1, 1]} : vector<2x96xf32> to vector<2x32xf32>
    %488 = vector.extract_strided_slice %470 {offsets = [0, 64], sizes = [2, 32], strides = [1, 1]} : vector<2x96xf32> to vector<2x32xf32>
    %489 = vector.broadcast %12 : vector<1x32xf32> to vector<2x32xf32>
    %490 = arith.addf %488, %489 : vector<2x32xf32>
    %491 = arith.mulf %478, %490 : vector<2x32xf32>
    %492 = arith.addf %487, %491 : vector<2x32xf32>
    %493 = math.tanh %492 : vector<2x32xf32>
    %cst_94 = arith.constant 1.000000e+00 : f32
    %494 = vector.broadcast %cst_94 : f32 to vector<2x32xf32>
    %495 = arith.subf %494, %486 : vector<2x32xf32>
    %496 = arith.mulf %495, %493 : vector<2x32xf32>
    %497 = arith.mulf %486, %429 : vector<2x32xf32>
    %498 = arith.addf %496, %497 : vector<2x32xf32>
    %499 = vector.broadcast %13 : vector<1x32xf32> to vector<2x32xf32>
    %500 = arith.mulf %498, %499 : vector<2x32xf32>
    %cst_95 = arith.constant dense<0.000000e+00> : vector<2xf32>
    %501 = vector.multi_reduction <add>, %500, %cst_95 [1] : vector<2x32xf32> to vector<2xf32>
    %502 = vector.shape_cast %501 : vector<2xf32> to vector<2x1xf32>
    %503 = vector.broadcast %14 : vector<1x1xf32> to vector<2x1xf32>
    %504 = arith.addf %502, %503 : vector<2x1xf32>
    %c12 = arith.constant 12 : index
    %c0_96 = arith.constant 0 : index
    %505 = vector.load %arg4[%c12, %c0_96] : memref<16x1xf32, #tpu.memory_space<vmem>>, vector<2x1xf32>
    tpu.vector_store %arg4[%c12, %c0_96], %504 {strides = array<i32>} : memref<16x1xf32, #tpu.memory_space<vmem>>, vector<2x1xf32>,
    %506 = vector.extract_strided_slice %18 {offsets = [14, 0], sizes = [2, 96], strides = [1, 1]} : vector<16x96xf32> to vector<2x96xf32>
    %cst_97 = arith.constant dense<0.000000e+00> : vector<2x96xf32>
    %507 = tpu.matmul %466, %3, %cst_97 {dimension_numbers = #tpu.dot_dimension_numbers<[1], [0], [0], [1], [0, 0, 1, 1], [], []>} : vector<2x32xf32>, vector<32x96xf32>, vector<2x96xf32> -> vector<2x96xf32>
    %508 = vector.extract_strided_slice %506 {offsets = [0, 0], sizes = [2, 32], strides = [1, 1]} : vector<2x96xf32> to vector<2x32xf32>
    %509 = vector.extract_strided_slice %507 {offsets = [0, 0], sizes = [2, 32], strides = [1, 1]} : vector<2x96xf32> to vector<2x32xf32>
    %510 = arith.addf %508, %509 : vector<2x32xf32>
    %511 = arith.negf %510 : vector<2x32xf32>
    %512 = math.exp %511 : vector<2x32xf32>
    %cst_98 = arith.constant 1.000000e+00 : f32
    %513 = vector.broadcast %cst_98 : f32 to vector<2x32xf32>
    %514 = arith.addf %513, %512 : vector<2x32xf32>
    %515 = arith.divf %513, %514 : vector<2x32xf32>
    %516 = vector.extract_strided_slice %506 {offsets = [0, 32], sizes = [2, 32], strides = [1, 1]} : vector<2x96xf32> to vector<2x32xf32>
    %517 = vector.extract_strided_slice %507 {offsets = [0, 32], sizes = [2, 32], strides = [1, 1]} : vector<2x96xf32> to vector<2x32xf32>
    %518 = arith.addf %516, %517 : vector<2x32xf32>
    %519 = arith.negf %518 : vector<2x32xf32>
    %520 = math.exp %519 : vector<2x32xf32>
    %cst_99 = arith.constant 1.000000e+00 : f32
    %521 = vector.broadcast %cst_99 : f32 to vector<2x32xf32>
    %522 = arith.addf %521, %520 : vector<2x32xf32>
    %523 = arith.divf %521, %522 : vector<2x32xf32>
    %524 = vector.extract_strided_slice %506 {offsets = [0, 64], sizes = [2, 32], strides = [1, 1]} : vector<2x96xf32> to vector<2x32xf32>
    %525 = vector.extract_strided_slice %507 {offsets = [0, 64], sizes = [2, 32], strides = [1, 1]} : vector<2x96xf32> to vector<2x32xf32>
    %526 = vector.broadcast %11 : vector<1x32xf32> to vector<2x32xf32>
    %527 = arith.addf %525, %526 : vector<2x32xf32>
    %528 = arith.mulf %515, %527 : vector<2x32xf32>
    %529 = arith.addf %524, %528 : vector<2x32xf32>
    %530 = math.tanh %529 : vector<2x32xf32>
    %cst_100 = arith.constant 1.000000e+00 : f32
    %531 = vector.broadcast %cst_100 : f32 to vector<2x32xf32>
    %532 = arith.subf %531, %523 : vector<2x32xf32>
    %533 = arith.mulf %532, %530 : vector<2x32xf32>
    %534 = arith.mulf %523, %466 : vector<2x32xf32>
    %535 = arith.addf %533, %534 : vector<2x32xf32>
    %cst_101 = arith.constant dense<0.000000e+00> : vector<2x96xf32>
    %536 = tpu.matmul %535, %5, %cst_101 {dimension_numbers = #tpu.dot_dimension_numbers<[1], [0], [0], [1], [0, 0, 1, 1], [], []>} : vector<2x32xf32>, vector<32x96xf32>, vector<2x96xf32> -> vector<2x96xf32>
    %537 = vector.broadcast %10 : vector<1x96xf32> to vector<2x96xf32>
    %538 = arith.addf %536, %537 : vector<2x96xf32>
    %cst_102 = arith.constant dense<0.000000e+00> : vector<2x96xf32>
    %539 = tpu.matmul %498, %7, %cst_102 {dimension_numbers = #tpu.dot_dimension_numbers<[1], [0], [0], [1], [0, 0, 1, 1], [], []>} : vector<2x32xf32>, vector<32x96xf32>, vector<2x96xf32> -> vector<2x96xf32>
    %540 = vector.extract_strided_slice %538 {offsets = [0, 0], sizes = [2, 32], strides = [1, 1]} : vector<2x96xf32> to vector<2x32xf32>
    %541 = vector.extract_strided_slice %539 {offsets = [0, 0], sizes = [2, 32], strides = [1, 1]} : vector<2x96xf32> to vector<2x32xf32>
    %542 = arith.addf %540, %541 : vector<2x32xf32>
    %543 = arith.negf %542 : vector<2x32xf32>
    %544 = math.exp %543 : vector<2x32xf32>
    %cst_103 = arith.constant 1.000000e+00 : f32
    %545 = vector.broadcast %cst_103 : f32 to vector<2x32xf32>
    %546 = arith.addf %545, %544 : vector<2x32xf32>
    %547 = arith.divf %545, %546 : vector<2x32xf32>
    %548 = vector.extract_strided_slice %538 {offsets = [0, 32], sizes = [2, 32], strides = [1, 1]} : vector<2x96xf32> to vector<2x32xf32>
    %549 = vector.extract_strided_slice %539 {offsets = [0, 32], sizes = [2, 32], strides = [1, 1]} : vector<2x96xf32> to vector<2x32xf32>
    %550 = arith.addf %548, %549 : vector<2x32xf32>
    %551 = arith.negf %550 : vector<2x32xf32>
    %552 = math.exp %551 : vector<2x32xf32>
    %cst_104 = arith.constant 1.000000e+00 : f32
    %553 = vector.broadcast %cst_104 : f32 to vector<2x32xf32>
    %554 = arith.addf %553, %552 : vector<2x32xf32>
    %555 = arith.divf %553, %554 : vector<2x32xf32>
    %556 = vector.extract_strided_slice %538 {offsets = [0, 64], sizes = [2, 32], strides = [1, 1]} : vector<2x96xf32> to vector<2x32xf32>
    %557 = vector.extract_strided_slice %539 {offsets = [0, 64], sizes = [2, 32], strides = [1, 1]} : vector<2x96xf32> to vector<2x32xf32>
    %558 = vector.broadcast %12 : vector<1x32xf32> to vector<2x32xf32>
    %559 = arith.addf %557, %558 : vector<2x32xf32>
    %560 = arith.mulf %547, %559 : vector<2x32xf32>
    %561 = arith.addf %556, %560 : vector<2x32xf32>
    %562 = math.tanh %561 : vector<2x32xf32>
    %cst_105 = arith.constant 1.000000e+00 : f32
    %563 = vector.broadcast %cst_105 : f32 to vector<2x32xf32>
    %564 = arith.subf %563, %555 : vector<2x32xf32>
    %565 = arith.mulf %564, %562 : vector<2x32xf32>
    %566 = arith.mulf %555, %498 : vector<2x32xf32>
    %567 = arith.addf %565, %566 : vector<2x32xf32>
    %568 = vector.broadcast %13 : vector<1x32xf32> to vector<2x32xf32>
    %569 = arith.mulf %567, %568 : vector<2x32xf32>
    %cst_106 = arith.constant dense<0.000000e+00> : vector<2xf32>
    %570 = vector.multi_reduction <add>, %569, %cst_106 [1] : vector<2x32xf32> to vector<2xf32>
    %571 = vector.shape_cast %570 : vector<2xf32> to vector<2x1xf32>
    %572 = vector.broadcast %14 : vector<1x1xf32> to vector<2x1xf32>
    %573 = arith.addf %571, %572 : vector<2x1xf32>
    %c14 = arith.constant 14 : index
    %c0_107 = arith.constant 0 : index
    %574 = vector.load %arg4[%c14, %c0_107] : memref<16x1xf32, #tpu.memory_space<vmem>>, vector<2x1xf32>
    tpu.vector_store %arg4[%c14, %c0_107], %573 {strides = array<i32>} : memref<16x1xf32, #tpu.memory_space<vmem>>, vector<2x1xf32>,
    %c0_108 = arith.constant 0 : index
    %c0_109 = arith.constant 0 : index
    %c0_110 = arith.constant 0 : index
    %575 = vector.load %arg5[%c0_108, %c0_109, %c0_110] : memref<2x2x32xf32, #tpu.memory_space<vmem>>, vector<1x2x32xf32>
    %576 = vector.shape_cast %575 : vector<1x2x32xf32> to vector<2x32xf32>
    %577 = vector.shape_cast %535 : vector<2x32xf32> to vector<1x2x32xf32>
    tpu.vector_store %arg5[%c0_108, %c0_109, %c0_110], %577 {strides = array<i32>} : memref<2x2x32xf32, #tpu.memory_space<vmem>>, vector<1x2x32xf32>,
    %c1_111 = arith.constant 1 : index
    %c0_112 = arith.constant 0 : index
    %c0_113 = arith.constant 0 : index
    %578 = vector.load %arg5[%c1_111, %c0_112, %c0_113] : memref<2x2x32xf32, #tpu.memory_space<vmem>>, vector<1x2x32xf32>
    %579 = vector.shape_cast %578 : vector<1x2x32xf32> to vector<2x32xf32>
    %580 = vector.shape_cast %567 : vector<2x32xf32> to vector<1x2x32xf32>
    tpu.vector_store %arg5[%c1_111, %c0_112, %c0_113], %580 {strides = array<i32>} : memref<2x2x32xf32, #tpu.memory_space<vmem>>, vector<1x2x32xf32>,
    return
  }
}

</mosaic_0001>

<llo_original>
// kernel: rnn_forward.1
$region0: #{rnn_forward.1}
  #allocation0 [shape = 'u32[]', space=smem, size = 0x4, offset = 0x4, fixed_abs, tag = 'smem constant byte address 0x4 - core index']
  #allocation1 [shape = 'u32[72,128]{1,0:T(1,128)}', space=vmem, size = 0x9000, scoped, tag = 'internal scratch']
  %s0 = inlined_call_operand.vmem [shape: f32[16,32], index: 0, kind: input, shape index: {}]
  %s1 = inlined_call_operand.vmem [shape: f32[2,2,32], index: 1, kind: input, shape index: {}]
  %s2 = inlined_call_operand.hbm [shape: f32[4,32,96], index: 2, kind: input, shape index: {}]
  %s3 = inlined_call_operand.vmem [shape: f32[4,96], index: 3, kind: input, shape index: {}]
  %s4 = inlined_call_operand.vmem [shape: f32[16,1], index: 4, kind: output, shape index: {0}]
  %s5 = inlined_call_operand.hbm [shape: f32[2,2,32], index: 5, kind: output, shape index: {1}]
  %6 = xla_tuple %s4, %s5
  %s7 = sld [smem:[#allocation0]]
  $region38: #{rnn_forward.1} parent=0
    _
  %s9 = ssub.s32 1, %s7
  %s10 = scalar_select 0, %s9, %s7
  $region1: #{rnn_forward.1} parent=0
    #allocation2 [shape = 'u8[65536]{0}', space=vmem, size = 0x10000, scoped, tag = 'input window, operand 2, single buffered']
    #allocation3 [shape = 's32[1]{0}', space=sflag, size = 0x4, scoped, tag = 'scoped memory for rnn_forward.1']
    #allocation4 [shape = 's32[1]{0}', space=sflag, size = 0x4, scoped, tag = 'scoped memory for rnn_forward.1']
    #allocation5 [shape = 'u8[2048]{0}', space=vmem, size = 0x800, scoped, tag = 'output window, operand 1, single buffered']
    %11 = vsyncpa [#allocation3], 0
    %12 = vsyncpa [#allocation4], 0
    // Predicated region
    $region2: #{rnn_forward.1} parent=1 // pred_check
      _
    $region3: #{rnn_forward.1} parent=1 // pred_check_branch
      %14 = sbr.rel (0) target = $region5
    $region4: #{rnn_forward.1} parent=1 // pred_region
      _
    $region5: #{rnn_forward.1} parent=1 // pred_fallthru
      _
    // Predicated region
    $region6: #{rnn_forward.1} parent=1 // pred_check
      _
    $region7: #{rnn_forward.1} parent=1 // pred_check_branch
      %16 = sbr.rel (0) target = $region9
    $region8: #{rnn_forward.1} parent=1 // pred_region
      _
    $region9: #{rnn_forward.1} parent=1 // pred_fallthru
      _
    // Predicated region
    $region10: #{rnn_forward.1} parent=1 // pred_check
      _
    $region11: #{rnn_forward.1} parent=1 // pred_check_branch
      %18 = sbr.rel (0) target = $region13
    $region12: #{rnn_forward.1} parent=1 // pred_region
      %20 = vsyncadd [#allocation3], 0
      %s21 = sshll.u32 %s2, 4
      %s22 = int_to_ptr.hbm [resolvable:$true] %s21
      %s23 = sshll.u32 [#allocation2], 4
      %s24 = int_to_ptr.vmem [resolvable:$true] %s23
      %29 = dma.hbm_to_vmem [thread:$0]  %s22, 2048, %s24, [#allocation3], 128, 128, 8
    $region13: #{rnn_forward.1} parent=1 // pred_fallthru
      _
    // Predicated region
    $region14: #{rnn_forward.1} parent=1 // pred_check
      _
    $region15: #{rnn_forward.1} parent=1 // pred_check_branch
      %31 = sbr.rel (0) target = $region17
    $region16: #{rnn_forward.1} parent=1 // pred_region
      _
    $region17: #{rnn_forward.1} parent=1 // pred_fallthru
      _
    // Predicated region
    $region18: #{rnn_forward.1} parent=1 // pred_check
      _
    $region19: #{rnn_forward.1} parent=1 // pred_check_branch
      %33 = sbr.rel (0) target = $region21
    $region20: #{rnn_forward.1} parent=1 // pred_region
      %35 = dma.done [#allocation3], 2048
    $region21: #{rnn_forward.1} parent=1 // pred_fallthru
      _
    %v36 = vld [vmem:[#allocation2] sm:$0xff]
    %v37 = vld [vmem:[#allocation2 + $0x8] sm:$0xff]
    %v38 = vld [vmem:[#allocation2 + $0x10] sm:$0xff]
    %v39 = vld [vmem:[#allocation2 + $0x18] sm:$0xff]
    %s40 = scalar_lea.vmem [#allocation2], 32
    %v41 = vld [vmem:[%s40] sm:$0xff]
    %v42 = vld [vmem:[%s40 + $0x8] sm:$0xff]
    %v43 = vld [vmem:[%s40 + $0x10] sm:$0xff]
    %v44 = vld [vmem:[%s40 + $0x18] sm:$0xff]
    %s45 = scalar_lea.vmem [#allocation2], 64
    %v46 = vld [vmem:[%s45] sm:$0xff]
    %v47 = vld [vmem:[%s45 + $0x8] sm:$0xff]
    %v48 = vld [vmem:[%s45 + $0x10] sm:$0xff]
    %v49 = vld [vmem:[%s45 + $0x18] sm:$0xff]
    %s50 = scalar_lea.vmem [#allocation2], 96
    %v51 = vld [vmem:[%s50] sm:$0xff]
    %v52 = vld [vmem:[%s50 + $0x8] sm:$0xff]
    %v53 = vld [vmem:[%s50 + $0x10] sm:$0xff]
    %v54 = vld [vmem:[%s50 + $0x18] sm:$0xff]
    %v55 = vld [vmem:[%s3] sm:$0xf]
    %v56 = vld [vmem:[%s0] sm:$0xff]
    %v57 = vld [vmem:[%s0 + $0x8] sm:$0xff]
    %v58 = vperm.slane %v55, 0
    %vm59 = vcmask 261120
    %v61 = vsel %vm59, %v56, 0
    %v64 = vsel %vm59, %v57, 0
    %66 = vmatpush.msra.mxu0 0.0
    %67 = vmatpush.msra.mxu0 0.0
    %68 = vmatpush.msra.mxu0 0.0
    %69 = vmatpush.msra.mxu0 0.0
    %70 = vmatpush.msra.mxu0 0.0
    %71 = vmatpush.msra.mxu0 0.0
    %72 = vmatpush.msra.mxu0 0.0
    %73 = vmatpush.msra.mxu0 0.0
    %74 = vmatpush.msra.mxu0 0.0
    %75 = vmatpush.msra.mxu0 0.0
    %76 = vmatpush.msra.mxu0 0.0
    %77 = vmatpush.msra.mxu0 0.0
    %78 = vmatpush.msra.mxu0 %v39
    %79 = vmatpush.msra.mxu0 %v38
    %80 = vmatpush.msra.mxu0 %v37
    %81 = vmatpush.msra.mxu0 %v36
    %82 = vmatmul.f32.gmra.mxu0 %v61
    %v83 = vpop.f32.mrf.mxu0
    %v84 = vadd.f32 %v58, %v83
    %85 = vmatmul.f32.gmra.mxu0 %v64
    %v86 = vpop.f32.mrf.mxu0
    %v87 = vadd.f32 %v58, %v86
    %88 = vdwg.mxu0
    %v89 = vld [vmem:[%s1] sm:$0x3]
    %s90 = scalar_lea.vmem %s1, 2
    %v91 = vld [vmem:[%s90] sm:$0x3]
    %v93 = vsel %vm59, %v89, 0
    %95 = vmatpush.msra.mxu0 0.0
    %96 = vmatpush.msra.mxu0 0.0
    %97 = vmatpush.msra.mxu0 0.0
    %98 = vmatpush.msra.mxu0 0.0
    %99 = vmatpush.msra.mxu0 0.0
    %100 = vmatpush.msra.mxu0 0.0
    %101 = vmatpush.msra.mxu0 0.0
    %102 = vmatpush.msra.mxu0 0.0
    %103 = vmatpush.msra.mxu0 0.0
    %104 = vmatpush.msra.mxu0 0.0
    %105 = vmatpush.msra.mxu0 0.0
    %106 = vmatpush.msra.mxu0 0.0
    %107 = vmatpush.msra.mxu0 %v44
    %108 = vmatpush.msra.mxu0 %v43
    %109 = vmatpush.msra.mxu0 %v42
    %110 = vmatpush.msra.mxu0 %v41
    %111 = vmatmul.f32.gmra.mxu0 %v93
    %v112 = vpop.f32.mrf.mxu0
    %v113 = vadd.f32 0.0, %v112
    %114 = vdwg.mxu0
    %v115 = vadd.f32 %v84, %v113
    %v116 = vxor.u32 %v115, 2147483648
    %v117 = vmul.f32 %v116, 1.442695
    %v118 = vpow.pop %v117
    %v119 = vadd.f32 %v118, 1.0
    %v120 = vrcp.pop %v119
    %v121 = vmul.f32 %v119, %v120
    %v122 = vsub.f32 1.0, %v121
    %v123 = vmul.f32 %v120, %v122
    %v124 = vadd.f32 %v120, %v123
    %vm125 = vweird.f32 %v119
    %vm126 = vweird.f32 %v120
    %vm127 = vmor %vm125, %vm126
    %v128 = vsel %vm127, %v120, %v124
    %v129 = vand.u32 2147483647, %v119
    %vm130 = vcmp.eq.f32.partialorder %v129, 8.507059e+37
    %v131 = vand.u32 %v119, 2147483648
    %v132 = vor.u32 1.1754944e-38, %v131
    %v133 = vsel %vm130, %v132, %v128
    %v134 = vmul.f32 1.0, %v133
    %v135 = vperm.slane %v55, 2
    %137 = vrot.lane.b32.xlu0 %v135, 64
    %v138 = vpop.permute.xlu0 %137
    %v140 = vadd.f32 %v113, %v138
    %142 = vrot.lane.b32.xlu0 %v140, 64
    %v143 = vpop.permute.xlu0 %142
    %v145 = vmul.f32 %v134, %v143
    %147 = vrot.lane.b32.xlu0 %v145, 64
    %v148 = vpop.permute.xlu0 %147
    %v150 = vadd.f32 %v84, %v148
    %v151 = vtanh.pop %v150
    %v152 = vsub.f32 1.0, %v134
    %154 = vrot.lane.b32.xlu0 %v151, 96
    %v155 = vpop.permute.xlu0 %154
    %v157 = vmul.f32 %v152, %v155
    %158 = vrot.lane.b32.xlu0 %v89, 32
    %v159 = vpop.permute.xlu0 %158
    %v161 = vmul.f32 %v134, %v159
    %v162 = vadd.f32 %v157, %v161
    %v163 = vperm.slane %v55, 1
    %165 = vrot.lane.b32.xlu0 %v162, 96
    %v166 = vpop.permute.xlu0 %165
    %v167 = vsel %vm59, %v166, 0
    %169 = vmatpush.msra.mxu0 0.0
    %170 = vmatpush.msra.mxu0 0.0
    %171 = vmatpush.msra.mxu0 0.0
    %172 = vmatpush.msra.mxu0 0.0
    %173 = vmatpush.msra.mxu0 0.0
    %174 = vmatpush.msra.mxu0 0.0
    %175 = vmatpush.msra.mxu0 0.0
    %176 = vmatpush.msra.mxu0 0.0
    %177 = vmatpush.msra.mxu0 0.0
    %178 = vmatpush.msra.mxu0 0.0
    %179 = vmatpush.msra.mxu0 0.0
    %180 = vmatpush.msra.mxu0 0.0
    %181 = vmatpush.msra.mxu0 %v49
    %182 = vmatpush.msra.mxu0 %v48
    %183 = vmatpush.msra.mxu0 %v47
    %184 = vmatpush.msra.mxu0 %v46
    %185 = vmatmul.f32.gmra.mxu0 %v167
    %v186 = vpop.f32.mrf.mxu0
    %v187 = vadd.f32 %v163, %v186
    %188 = vdwg.mxu0
    %v190 = vsel %vm59, %v91, 0
    %192 = vmatpush.msra.mxu0 0.0
    %193 = vmatpush.msra.mxu0 0.0
    %194 = vmatpush.msra.mxu0 0.0
    %195 = vmatpush.msra.mxu0 0.0
    %196 = vmatpush.msra.mxu0 0.0
    %197 = vmatpush.msra.mxu0 0.0
    %198 = vmatpush.msra.mxu0 0.0
    %199 = vmatpush.msra.mxu0 0.0
    %200 = vmatpush.msra.mxu0 0.0
    %201 = vmatpush.msra.mxu0 0.0
    %202 = vmatpush.msra.mxu0 0.0
    %203 = vmatpush.msra.mxu0 0.0
    %204 = vmatpush.msra.mxu0 %v54
    %205 = vmatpush.msra.mxu0 %v53
    %206 = vmatpush.msra.mxu0 %v52
    %207 = vmatpush.msra.mxu0 %v51
    %208 = vmatmul.f32.gmra.mxu0 %v190
    %v209 = vpop.f32.mrf.mxu0
    %v210 = vadd.f32 0.0, %v209
    %211 = vdwg.mxu0
    %v212 = vadd.f32 %v187, %v210
    %v213 = vxor.u32 %v212, 2147483648
    %v214 = vmul.f32 %v213, 1.442695
    %v215 = vpow.pop %v214
    %v216 = vadd.f32 %v215, 1.0
    %v217 = vrcp.pop %v216
    %v218 = vmul.f32 %v216, %v217
    %v219 = vsub.f32 1.0, %v218
    %v220 = vmul.f32 %v217, %v219
    %v221 = vadd.f32 %v217, %v220
    %vm222 = vweird.f32 %v216
    %vm223 = vweird.f32 %v217
    %vm224 = vmor %vm222, %vm223
    %v225 = vsel %vm224, %v217, %v221
    %v226 = vand.u32 2147483647, %v216
    %vm227 = vcmp.eq.f32.partialorder %v226, 8.507059e+37
    %v228 = vand.u32 %v216, 2147483648
    %v229 = vor.u32 1.1754944e-38, %v228
    %v230 = vsel %vm227, %v229, %v225
    %v231 = vmul.f32 1.0, %v230
    %232 = vrot.lane.b32.xlu0 %v135, 32
    %v233 = vpop.permute.xlu0 %232
    %v235 = vadd.f32 %v210, %v233
    %237 = vrot.lane.b32.xlu0 %v235, 64
    %v238 = vpop.permute.xlu0 %237
    %v240 = vmul.f32 %v231, %v238
    %242 = vrot.lane.b32.xlu0 %v240, 64
    %v243 = vpop.permute.xlu0 %242
    %v245 = vadd.f32 %v187, %v243
    %v246 = vtanh.pop %v245
    %v247 = vsub.f32 1.0, %v231
    %249 = vrot.lane.b32.xlu0 %v246, 96
    %v250 = vpop.permute.xlu0 %249
    %v252 = vmul.f32 %v247, %v250
    %253 = vrot.lane.b32.xlu0 %v91, 32
    %v254 = vpop.permute.xlu0 %253
    %v256 = vmul.f32 %v231, %v254
    %v257 = vadd.f32 %v252, %v256
    %258 = vrot.lane.b32.xlu0 %v135, 96
    %v259 = vpop.permute.xlu0 %258
    %v261 = vmul.f32 %v257, %v259
    %263 = vrot.lane.b32.xlu0 %v261, 96
    %v264 = vpop.permute.xlu0 %263
    %vm266 = vcmask 254976
    %v267 = vsel %vm266, %v264, 0.0
    %268 = vadd.xlane.f32.xlu0 %v267
    %v269 = vpop.xlane.xlu0 %268
    %v270 = vperm.slane %v55, 3
    %v271 = vadd.f32 %v269, %v270
    %vm272 = vcmask 1024
    %273 = vst.msk [vmem:[%s4] sm:$0x3] %vm272, %v271
    %274 = vmatpush.msra.mxu0 0.0
    %275 = vmatpush.msra.mxu0 0.0
    %276 = vmatpush.msra.mxu0 0.0
    %277 = vmatpush.msra.mxu0 0.0
    %278 = vmatpush.msra.mxu0 0.0
    %279 = vmatpush.msra.mxu0 0.0
    %280 = vmatpush.msra.mxu0 0.0
    %281 = vmatpush.msra.mxu0 0.0
    %282 = vmatpush.msra.mxu0 0.0
    %283 = vmatpush.msra.mxu0 0.0
    %284 = vmatpush.msra.mxu0 0.0
    %285 = vmatpush.msra.mxu0 0.0
    %286 = vmatpush.msra.mxu0 %v44
    %287 = vmatpush.msra.mxu0 %v43
    %288 = vmatpush.msra.mxu0 %v42
    %289 = vmatpush.msra.mxu0 %v41
    %290 = vmatmul.f32.gmra.mxu0 %v167
    %v291 = vpop.f32.mrf.mxu0
    %v292 = vadd.f32 0.0, %v291
    %293 = vdwg.mxu0
    %v295 = vrot.slane %v292, 6
    %v297 = vadd.f32 %v84, %v295
    %v298 = vxor.u32 %v297, 2147483648
    %v299 = vmul.f32 %v298, 1.442695
    %v300 = vpow.pop %v299
    %v301 = vadd.f32 %v300, 1.0
    %v302 = vrcp.pop %v301
    %v303 = vmul.f32 %v301, %v302
    %v304 = vsub.f32 1.0, %v303
    %v305 = vmul.f32 %v302, %v304
    %v306 = vadd.f32 %v302, %v305
    %vm307 = vweird.f32 %v301
    %vm308 = vweird.f32 %v302
    %vm309 = vmor %vm307, %vm308
    %v310 = vsel %vm309, %v302, %v306
    %v311 = vand.u32 2147483647, %v301
    %vm312 = vcmp.eq.f32.partialorder %v311, 8.507059e+37
    %v313 = vand.u32 %v301, 2147483648
    %v314 = vor.u32 1.1754944e-38, %v313
    %v315 = vsel %vm312, %v314, %v310
    %v316 = vmul.f32 1.0, %v315
    %v317 = vadd.f32 %v292, %v138
    %v319 = vrot.slane %v317, 6
    %320 = vrot.lane.b32.xlu0 %v319, 64
    %v321 = vpop.permute.xlu0 %320
    %v323 = vmul.f32 %v316, %v321
    %325 = vrot.lane.b32.xlu0 %v323, 64
    %v326 = vpop.permute.xlu0 %325
    %v328 = vadd.f32 %v84, %v326
    %v329 = vtanh.pop %v328
    %v330 = vsub.f32 1.0, %v316
    %332 = vrot.lane.b32.xlu0 %v329, 96
    %v333 = vpop.permute.xlu0 %332
    %v335 = vmul.f32 %v330, %v333
    %v336 = vrot.slane %v162, 6
    %v338 = vmul.f32 %v316, %v336
    %v339 = vadd.f32 %v335, %v338
    %v341 = vrot.slane %v339, 2
    %342 = vrot.lane.b32.xlu0 %v341, 96
    %v343 = vpop.permute.xlu0 %342
    %v344 = vsel %vm59, %v343, 0
    %346 = vmatpush.msra.mxu0 0.0
    %347 = vmatpush.msra.mxu0 0.0
    %348 = vmatpush.msra.mxu0 0.0
    %349 = vmatpush.msra.mxu0 0.0
    %350 = vmatpush.msra.mxu0 0.0
    %351 = vmatpush.msra.mxu0 0.0
    %352 = vmatpush.msra.mxu0 0.0
    %353 = vmatpush.msra.mxu0 0.0
    %354 = vmatpush.msra.mxu0 0.0
    %355 = vmatpush.msra.mxu0 0.0
    %356 = vmatpush.msra.mxu0 0.0
    %357 = vmatpush.msra.mxu0 0.0
    %358 = vmatpush.msra.mxu0 %v49
    %359 = vmatpush.msra.mxu0 %v48
    %360 = vmatpush.msra.mxu0 %v47
    %361 = vmatpush.msra.mxu0 %v46
    %362 = vmatmul.f32.gmra.mxu0 %v344
    %v363 = vpop.f32.mrf.mxu0
    %v364 = vadd.f32 %v163, %v363
    %365 = vdwg.mxu0
    %367 = vrot.lane.b32.xlu0 %v257, 96
    %v368 = vpop.permute.xlu0 %367
    %v369 = vsel %vm59, %v368, 0
    %371 = vmatpush.msra.mxu0 0.0
    %372 = vmatpush.msra.mxu0 0.0
    %373 = vmatpush.msra.mxu0 0.0
    %374 = vmatpush.msra.mxu0 0.0
    %375 = vmatpush.msra.mxu0 0.0
    %376 = vmatpush.msra.mxu0 0.0
    %377 = vmatpush.msra.mxu0 0.0
    %378 = vmatpush.msra.mxu0 0.0
    %379 = vmatpush.msra.mxu0 0.0
    %380 = vmatpush.msra.mxu0 0.0
    %381 = vmatpush.msra.mxu0 0.0
    %382 = vmatpush.msra.mxu0 0.0
    %383 = vmatpush.msra.mxu0 %v54
    %384 = vmatpush.msra.mxu0 %v53
    %385 = vmatpush.msra.mxu0 %v52
    %386 = vmatpush.msra.mxu0 %v51
    %387 = vmatmul.f32.gmra.mxu0 %v369
    %v388 = vpop.f32.mrf.mxu0
    %v389 = vadd.f32 0.0, %v388
    %390 = vdwg.mxu0
    %v391 = vadd.f32 %v364, %v389
    %v392 = vxor.u32 %v391, 2147483648
    %v393 = vmul.f32 %v392, 1.442695
    %v394 = vpow.pop %v393
    %v395 = vadd.f32 %v394, 1.0
    %v396 = vrcp.pop %v395
    %v397 = vmul.f32 %v395, %v396
    %v398 = vsub.f32 1.0, %v397
    %v399 = vmul.f32 %v396, %v398
    %v400 = vadd.f32 %v396, %v399
    %vm401 = vweird.f32 %v395
    %vm402 = vweird.f32 %v396
    %vm403 = vmor %vm401, %vm402
    %v404 = vsel %vm403, %v396, %v400
    %v405 = vand.u32 2147483647, %v395
    %vm406 = vcmp.eq.f32.partialorder %v405, 8.507059e+37
    %v407 = vand.u32 %v395, 2147483648
    %v408 = vor.u32 1.1754944e-38, %v407
    %v409 = vsel %vm406, %v408, %v404
    %v410 = vmul.f32 1.0, %v409
    %v411 = vadd.f32 %v389, %v233
    %413 = vrot.lane.b32.xlu0 %v411, 64
    %v414 = vpop.permute.xlu0 %413
    %v416 = vmul.f32 %v410, %v414
    %418 = vrot.lane.b32.xlu0 %v416, 64
    %v419 = vpop.permute.xlu0 %418
    %v421 = vadd.f32 %v364, %v419
    %v422 = vtanh.pop %v421
    %v423 = vsub.f32 1.0, %v410
    %425 = vrot.lane.b32.xlu0 %v422, 96
    %v426 = vpop.permute.xlu0 %425
    %v428 = vmul.f32 %v423, %v426
    %v429 = vmul.f32 %v410, %v257
    %v430 = vadd.f32 %v428, %v429
    %v431 = vmul.f32 %v430, %v259
    %433 = vrot.lane.b32.xlu0 %v431, 96
    %v434 = vpop.permute.xlu0 %433
    %v436 = vsel %vm266, %v434, 0.0
    %437 = vadd.xlane.f32.xlu0 %v436
    %v438 = vpop.xlane.xlu0 %437
    %v439 = vadd.f32 %v438, %v270
    %440 = vst.msk [vmem:[%s4 + $0x2] sm:$0x3] %vm272, %v439
    %441 = vmatpush.msra.mxu0 0.0
    %442 = vmatpush.msra.mxu0 0.0
    %443 = vmatpush.msra.mxu0 0.0
    %444 = vmatpush.msra.mxu0 0.0
    %445 = vmatpush.msra.mxu0 0.0
    %446 = vmatpush.msra.mxu0 0.0
    %447 = vmatpush.msra.mxu0 0.0
    %448 = vmatpush.msra.mxu0 0.0
    %449 = vmatpush.msra.mxu0 0.0
    %450 = vmatpush.msra.mxu0 0.0
    %451 = vmatpush.msra.mxu0 0.0
    %452 = vmatpush.msra.mxu0 0.0
    %453 = vmatpush.msra.mxu0 %v44
    %454 = vmatpush.msra.mxu0 %v43
    %455 = vmatpush.msra.mxu0 %v42
    %456 = vmatpush.msra.mxu0 %v41
    %457 = vmatmul.f32.gmra.mxu0 %v344
    %v458 = vpop.f32.mrf.mxu0
    %v459 = vadd.f32 0.0, %v458
    %460 = vdwg.mxu0
    %v462 = vrot.slane %v459, 4
    %v464 = vadd.f32 %v84, %v462
    %v465 = vxor.u32 %v464, 2147483648
    %v466 = vmul.f32 %v465, 1.442695
    %v467 = vpow.pop %v466
    %v468 = vadd.f32 %v467, 1.0
    %v469 = vrcp.pop %v468
    %v470 = vmul.f32 %v468, %v469
    %v471 = vsub.f32 1.0, %v470
    %v472 = vmul.f32 %v469, %v471
    %v473 = vadd.f32 %v469, %v472
    %vm474 = vweird.f32 %v468
    %vm475 = vweird.f32 %v469
    %vm476 = vmor %vm474, %vm475
    %v477 = vsel %vm476, %v469, %v473
    %v478 = vand.u32 2147483647, %v468
    %vm479 = vcmp.eq.f32.partialorder %v478, 8.507059e+37
    %v480 = vand.u32 %v468, 2147483648
    %v481 = vor.u32 1.1754944e-38, %v480
    %v482 = vsel %vm479, %v481, %v477
    %v483 = vmul.f32 1.0, %v482
    %v484 = vadd.f32 %v459, %v138
    %v486 = vrot.slane %v484, 4
    %487 = vrot.lane.b32.xlu0 %v486, 64
    %v488 = vpop.permute.xlu0 %487
    %v490 = vmul.f32 %v483, %v488
    %492 = vrot.lane.b32.xlu0 %v490, 64
    %v493 = vpop.permute.xlu0 %492
    %v495 = vadd.f32 %v84, %v493
    %v496 = vtanh.pop %v495
    %v497 = vsub.f32 1.0, %v483
    %499 = vrot.lane.b32.xlu0 %v496, 96
    %v500 = vpop.permute.xlu0 %499
    %v502 = vmul.f32 %v497, %v500
    %v503 = vrot.slane %v339, 6
    %v505 = vmul.f32 %v483, %v503
    %v506 = vadd.f32 %v502, %v505
    %v508 = vrot.slane %v506, 4
    %509 = vrot.lane.b32.xlu0 %v508, 96
    %v510 = vpop.permute.xlu0 %509
    %v511 = vsel %vm59, %v510, 0
    %513 = vmatpush.msra.mxu0 0.0
    %514 = vmatpush.msra.mxu0 0.0
    %515 = vmatpush.msra.mxu0 0.0
    %516 = vmatpush.msra.mxu0 0.0
    %517 = vmatpush.msra.mxu0 0.0
    %518 = vmatpush.msra.mxu0 0.0
    %519 = vmatpush.msra.mxu0 0.0
    %520 = vmatpush.msra.mxu0 0.0
    %521 = vmatpush.msra.mxu0 0.0
    %522 = vmatpush.msra.mxu0 0.0
    %523 = vmatpush.msra.mxu0 0.0
    %524 = vmatpush.msra.mxu0 0.0
    %525 = vmatpush.msra.mxu0 %v49
    %526 = vmatpush.msra.mxu0 %v48
    %527 = vmatpush.msra.mxu0 %v47
    %528 = vmatpush.msra.mxu0 %v46
    %529 = vmatmul.f32.gmra.mxu0 %v511
    %v530 = vpop.f32.mrf.mxu0
    %v531 = vadd.f32 %v163, %v530
    %532 = vdwg.mxu0
    %534 = vrot.lane.b32.xlu0 %v430, 96
    %v535 = vpop.permute.xlu0 %534
    %v536 = vsel %vm59, %v535, 0
    %538 = vmatpush.msra.mxu0 0.0
    %539 = vmatpush.msra.mxu0 0.0
    %540 = vmatpush.msra.mxu0 0.0
    %541 = vmatpush.msra.mxu0 0.0
    %542 = vmatpush.msra.mxu0 0.0
    %543 = vmatpush.msra.mxu0 0.0
    %544 = vmatpush.msra.mxu0 0.0
    %545 = vmatpush.msra.mxu0 0.0
    %546 = vmatpush.msra.mxu0 0.0
    %547 = vmatpush.msra.mxu0 0.0
    %548 = vmatpush.msra.mxu0 0.0
    %549 = vmatpush.msra.mxu0 0.0
    %550 = vmatpush.msra.mxu0 %v54
    %551 = vmatpush.msra.mxu0 %v53
    %552 = vmatpush.msra.mxu0 %v52
    %553 = vmatpush.msra.mxu0 %v51
    %554 = vmatmul.f32.gmra.mxu0 %v536
    %v555 = vpop.f32.mrf.mxu0
    %v556 = vadd.f32 0.0, %v555
    %557 = vdwg.mxu0
    %v558 = vadd.f32 %v531, %v556
    %v559 = vxor.u32 %v558, 2147483648
    %v560 = vmul.f32 %v559, 1.442695
    %v561 = vpow.pop %v560
    %v562 = vadd.f32 %v561, 1.0
    %v563 = vrcp.pop %v562
    %v564 = vmul.f32 %v562, %v563
    %v565 = vsub.f32 1.0, %v564
    %v566 = vmul.f32 %v563, %v565
    %v567 = vadd.f32 %v563, %v566
    %vm568 = vweird.f32 %v562
    %vm569 = vweird.f32 %v563
    %vm570 = vmor %vm568, %vm569
    %v571 = vsel %vm570, %v563, %v567
    %v572 = vand.u32 2147483647, %v562
    %vm573 = vcmp.eq.f32.partialorder %v572, 8.507059e+37
    %v574 = vand.u32 %v562, 2147483648
    %v575 = vor.u32 1.1754944e-38, %v574
    %v576 = vsel %vm573, %v575, %v571
    %v577 = vmul.f32 1.0, %v576
    %v578 = vadd.f32 %v556, %v233
    %580 = vrot.lane.b32.xlu0 %v578, 64
    %v581 = vpop.permute.xlu0 %580
    %v583 = vmul.f32 %v577, %v581
    %585 = vrot.lane.b32.xlu0 %v583, 64
    %v586 = vpop.permute.xlu0 %585
    %v588 = vadd.f32 %v531, %v586
    %v589 = vtanh.pop %v588
    %v590 = vsub.f32 1.0, %v577
    %592 = vrot.lane.b32.xlu0 %v589, 96
    %v593 = vpop.permute.xlu0 %592
    %v595 = vmul.f32 %v590, %v593
    %v596 = vmul.f32 %v577, %v430
    %v597 = vadd.f32 %v595, %v596
    %v598 = vmul.f32 %v597, %v259
    %600 = vrot.lane.b32.xlu0 %v598, 96
    %v601 = vpop.permute.xlu0 %600
    %v603 = vsel %vm266, %v601, 0.0
    %604 = vadd.xlane.f32.xlu0 %v603
    %v605 = vpop.xlane.xlu0 %604
    %v606 = vadd.f32 %v605, %v270
    %607 = vst.msk [vmem:[%s4 + $0x4] sm:$0x3] %vm272, %v606
    %608 = vmatpush.msra.mxu0 0.0
    %609 = vmatpush.msra.mxu0 0.0
    %610 = vmatpush.msra.mxu0 0.0
    %611 = vmatpush.msra.mxu0 0.0
    %612 = vmatpush.msra.mxu0 0.0
    %613 = vmatpush.msra.mxu0 0.0
    %614 = vmatpush.msra.mxu0 0.0
    %615 = vmatpush.msra.mxu0 0.0
    %616 = vmatpush.msra.mxu0 0.0
    %617 = vmatpush.msra.mxu0 0.0
    %618 = vmatpush.msra.mxu0 0.0
    %619 = vmatpush.msra.mxu0 0.0
    %620 = vmatpush.msra.mxu0 %v44
    %621 = vmatpush.msra.mxu0 %v43
    %622 = vmatpush.msra.mxu0 %v42
    %623 = vmatpush.msra.mxu0 %v41
    %624 = vmatmul.f32.gmra.mxu0 %v511
    %v625 = vpop.f32.mrf.mxu0
    %v626 = vadd.f32 0.0, %v625
    %627 = vdwg.mxu0
    %v629 = vrot.slane %v626, 2
    %v631 = vadd.f32 %v84, %v629
    %v632 = vxor.u32 %v631, 2147483648
    %v633 = vmul.f32 %v632, 1.442695
    %v634 = vpow.pop %v633
    %v635 = vadd.f32 %v634, 1.0
    %v636 = vrcp.pop %v635
    %v637 = vmul.f32 %v635, %v636
    %v638 = vsub.f32 1.0, %v637
    %v639 = vmul.f32 %v636, %v638
    %v640 = vadd.f32 %v636, %v639
    %vm641 = vweird.f32 %v635
    %vm642 = vweird.f32 %v636
    %vm643 = vmor %vm641, %vm642
    %v644 = vsel %vm643, %v636, %v640
    %v645 = vand.u32 2147483647, %v635
    %vm646 = vcmp.eq.f32.partialorder %v645, 8.507059e+37
    %v647 = vand.u32 %v635, 2147483648
    %v648 = vor.u32 1.1754944e-38, %v647
    %v649 = vsel %vm646, %v648, %v644
    %v650 = vmul.f32 1.0, %v649
    %v651 = vadd.f32 %v626, %v138
    %v653 = vrot.slane %v651, 2
    %654 = vrot.lane.b32.xlu0 %v653, 64
    %v655 = vpop.permute.xlu0 %654
    %v657 = vmul.f32 %v650, %v655
    %659 = vrot.lane.b32.xlu0 %v657, 64
    %v660 = vpop.permute.xlu0 %659
    %v662 = vadd.f32 %v84, %v660
    %v663 = vtanh.pop %v662
    %v664 = vsub.f32 1.0, %v650
    %666 = vrot.lane.b32.xlu0 %v663, 96
    %v667 = vpop.permute.xlu0 %666
    %v669 = vmul.f32 %v664, %v667
    %v670 = vrot.slane %v506, 6
    %v672 = vmul.f32 %v650, %v670
    %v673 = vadd.f32 %v669, %v672
    %v675 = vrot.slane %v673, 6
    %676 = vrot.lane.b32.xlu0 %v675, 96
    %v677 = vpop.permute.xlu0 %676
    %v678 = vsel %vm59, %v677, 0
    %680 = vmatpush.msra.mxu0 0.0
    %681 = vmatpush.msra.mxu0 0.0
    %682 = vmatpush.msra.mxu0 0.0
    %683 = vmatpush.msra.mxu0 0.0
    %684 = vmatpush.msra.mxu0 0.0
    %685 = vmatpush.msra.mxu0 0.0
    %686 = vmatpush.msra.mxu0 0.0
    %687 = vmatpush.msra.mxu0 0.0
    %688 = vmatpush.msra.mxu0 0.0
    %689 = vmatpush.msra.mxu0 0.0
    %690 = vmatpush.msra.mxu0 0.0
    %691 = vmatpush.msra.mxu0 0.0
    %692 = vmatpush.msra.mxu0 %v49
    %693 = vmatpush.msra.mxu0 %v48
    %694 = vmatpush.msra.mxu0 %v47
    %695 = vmatpush.msra.mxu0 %v46
    %696 = vmatmul.f32.gmra.mxu0 %v678
    %v697 = vpop.f32.mrf.mxu0
    %v698 = vadd.f32 %v163, %v697
    %699 = vdwg.mxu0
    %701 = vrot.lane.b32.xlu0 %v597, 96
    %v702 = vpop.permute.xlu0 %701
    %v703 = vsel %vm59, %v702, 0
    %705 = vmatpush.msra.mxu0 0.0
    %706 = vmatpush.msra.mxu0 0.0
    %707 = vmatpush.msra.mxu0 0.0
    %708 = vmatpush.msra.mxu0 0.0
    %709 = vmatpush.msra.mxu0 0.0
    %710 = vmatpush.msra.mxu0 0.0
    %711 = vmatpush.msra.mxu0 0.0
    %712 = vmatpush.msra.mxu0 0.0
    %713 = vmatpush.msra.mxu0 0.0
    %714 = vmatpush.msra.mxu0 0.0
    %715 = vmatpush.msra.mxu0 0.0
    %716 = vmatpush.msra.mxu0 0.0
    %717 = vmatpush.msra.mxu0 %v54
    %718 = vmatpush.msra.mxu0 %v53
    %719 = vmatpush.msra.mxu0 %v52
    %720 = vmatpush.msra.mxu0 %v51
    %721 = vmatmul.f32.gmra.mxu0 %v703
    %v722 = vpop.f32.mrf.mxu0
    %v723 = vadd.f32 0.0, %v722
    %724 = vdwg.mxu0
    %v725 = vadd.f32 %v698, %v723
    %v726 = vxor.u32 %v725, 2147483648
    %v727 = vmul.f32 %v726, 1.442695
    %v728 = vpow.pop %v727
    %v729 = vadd.f32 %v728, 1.0
    %v730 = vrcp.pop %v729
    %v731 = vmul.f32 %v729, %v730
    %v732 = vsub.f32 1.0, %v731
    %v733 = vmul.f32 %v730, %v732
    %v734 = vadd.f32 %v730, %v733
    %vm735 = vweird.f32 %v729
    %vm736 = vweird.f32 %v730
    %vm737 = vmor %vm735, %vm736
    %v738 = vsel %vm737, %v730, %v734
    %v739 = vand.u32 2147483647, %v729
    %vm740 = vcmp.eq.f32.partialorder %v739, 8.507059e+37
    %v741 = vand.u32 %v729, 2147483648
    %v742 = vor.u32 1.1754944e-38, %v741
    %v743 = vsel %vm740, %v742, %v738
    %v744 = vmul.f32 1.0, %v743
    %v745 = vadd.f32 %v723, %v233
    %747 = vrot.lane.b32.xlu0 %v745, 64
    %v748 = vpop.permute.xlu0 %747
    %v750 = vmul.f32 %v744, %v748
    %752 = vrot.lane.b32.xlu0 %v750, 64
    %v753 = vpop.permute.xlu0 %752
    %v755 = vadd.f32 %v698, %v753
    %v756 = vtanh.pop %v755
    %v757 = vsub.f32 1.0, %v744
    %759 = vrot.lane.b32.xlu0 %v756, 96
    %v760 = vpop.permute.xlu0 %759
    %v762 = vmul.f32 %v757, %v760
    %v763 = vmul.f32 %v744, %v597
    %v764 = vadd.f32 %v762, %v763
    %v765 = vmul.f32 %v764, %v259
    %767 = vrot.lane.b32.xlu0 %v765, 96
    %v768 = vpop.permute.xlu0 %767
    %v770 = vsel %vm266, %v768, 0.0
    %771 = vadd.xlane.f32.xlu0 %v770
    %v772 = vpop.xlane.xlu0 %771
    %v773 = vadd.f32 %v772, %v270
    %774 = vst.msk [vmem:[%s4 + $0x6] sm:$0x3] %vm272, %v773
    %775 = vmatpush.msra.mxu0 0.0
    %776 = vmatpush.msra.mxu0 0.0
    %777 = vmatpush.msra.mxu0 0.0
    %778 = vmatpush.msra.mxu0 0.0
    %779 = vmatpush.msra.mxu0 0.0
    %780 = vmatpush.msra.mxu0 0.0
    %781 = vmatpush.msra.mxu0 0.0
    %782 = vmatpush.msra.mxu0 0.0
    %783 = vmatpush.msra.mxu0 0.0
    %784 = vmatpush.msra.mxu0 0.0
    %785 = vmatpush.msra.mxu0 0.0
    %786 = vmatpush.msra.mxu0 0.0
    %787 = vmatpush.msra.mxu0 %v44
    %788 = vmatpush.msra.mxu0 %v43
    %789 = vmatpush.msra.mxu0 %v42
    %790 = vmatpush.msra.mxu0 %v41
    %791 = vmatmul.f32.gmra.mxu0 %v678
    %v792 = vpop.f32.mrf.mxu0
    %v793 = vadd.f32 0.0, %v792
    %794 = vdwg.mxu0
    %v795 = vadd.f32 %v87, %v793
    %v796 = vxor.u32 %v795, 2147483648
    %v797 = vmul.f32 %v796, 1.442695
    %v798 = vpow.pop %v797
    %v799 = vadd.f32 %v798, 1.0
    %v800 = vrcp.pop %v799
    %v801 = vmul.f32 %v799, %v800
    %v802 = vsub.f32 1.0, %v801
    %v803 = vmul.f32 %v800, %v802
    %v804 = vadd.f32 %v800, %v803
    %vm805 = vweird.f32 %v799
    %vm806 = vweird.f32 %v800
    %vm807 = vmor %vm805, %vm806
    %v808 = vsel %vm807, %v800, %v804
    %v809 = vand.u32 2147483647, %v799
    %vm810 = vcmp.eq.f32.partialorder %v809, 8.507059e+37
    %v811 = vand.u32 %v799, 2147483648
    %v812 = vor.u32 1.1754944e-38, %v811
    %v813 = vsel %vm810, %v812, %v808
    %v814 = vmul.f32 1.0, %v813
    %v815 = vadd.f32 %v793, %v138
    %817 = vrot.lane.b32.xlu0 %v815, 64
    %v818 = vpop.permute.xlu0 %817
    %v820 = vmul.f32 %v814, %v818
    %822 = vrot.lane.b32.xlu0 %v820, 64
    %v823 = vpop.permute.xlu0 %822
    %v825 = vadd.f32 %v87, %v823
    %v826 = vtanh.pop %v825
    %v827 = vsub.f32 1.0, %v814
    %829 = vrot.lane.b32.xlu0 %v826, 96
    %v830 = vpop.permute.xlu0 %829
    %v832 = vmul.f32 %v827, %v830
    %v834 = vmul.f32 %v814, %v675
    %v835 = vadd.f32 %v832, %v834
    %837 = vrot.lane.b32.xlu0 %v835, 96
    %v838 = vpop.permute.xlu0 %837
    %v839 = vsel %vm59, %v838, 0
    %841 = vmatpush.msra.mxu0 0.0
    %842 = vmatpush.msra.mxu0 0.0
    %843 = vmatpush.msra.mxu0 0.0
    %844 = vmatpush.msra.mxu0 0.0
    %845 = vmatpush.msra.mxu0 0.0
    %846 = vmatpush.msra.mxu0 0.0
    %847 = vmatpush.msra.mxu0 0.0
    %848 = vmatpush.msra.mxu0 0.0
    %849 = vmatpush.msra.mxu0 0.0
    %850 = vmatpush.msra.mxu0 0.0
    %851 = vmatpush.msra.mxu0 0.0
    %852 = vmatpush.msra.mxu0 0.0
    %853 = vmatpush.msra.mxu0 %v49
    %854 = vmatpush.msra.mxu0 %v48
    %855 = vmatpush.msra.mxu0 %v47
    %856 = vmatpush.msra.mxu0 %v46
    %857 = vmatmul.f32.gmra.mxu0 %v839
    %v858 = vpop.f32.mrf.mxu0
    %v859 = vadd.f32 %v163, %v858
    %860 = vdwg.mxu0
    %862 = vrot.lane.b32.xlu0 %v764, 96
    %v863 = vpop.permute.xlu0 %862
    %v864 = vsel %vm59, %v863, 0
    %866 = vmatpush.msra.mxu0 0.0
    %867 = vmatpush.msra.mxu0 0.0
    %868 = vmatpush.msra.mxu0 0.0
    %869 = vmatpush.msra.mxu0 0.0
    %870 = vmatpush.msra.mxu0 0.0
    %871 = vmatpush.msra.mxu0 0.0
    %872 = vmatpush.msra.mxu0 0.0
    %873 = vmatpush.msra.mxu0 0.0
    %874 = vmatpush.msra.mxu0 0.0
    %875 = vmatpush.msra.mxu0 0.0
    %876 = vmatpush.msra.mxu0 0.0
    %877 = vmatpush.msra.mxu0 0.0
    %878 = vmatpush.msra.mxu0 %v54
    %879 = vmatpush.msra.mxu0 %v53
    %880 = vmatpush.msra.mxu0 %v52
    %881 = vmatpush.msra.mxu0 %v51
    %882 = vmatmul.f32.gmra.mxu0 %v864
    %v883 = vpop.f32.mrf.mxu0
    %v884 = vadd.f32 0.0, %v883
    %885 = vdwg.mxu0
    %v886 = vadd.f32 %v859, %v884
    %v887 = vxor.u32 %v886, 2147483648
    %v888 = vmul.f32 %v887, 1.442695
    %v889 = vpow.pop %v888
    %v890 = vadd.f32 %v889, 1.0
    %v891 = vrcp.pop %v890
    %v892 = vmul.f32 %v890, %v891
    %v893 = vsub.f32 1.0, %v892
    %v894 = vmul.f32 %v891, %v893
    %v895 = vadd.f32 %v891, %v894
    %vm896 = vweird.f32 %v890
    %vm897 = vweird.f32 %v891
    %vm898 = vmor %vm896, %vm897
    %v899 = vsel %vm898, %v891, %v895
    %v900 = vand.u32 2147483647, %v890
    %vm901 = vcmp.eq.f32.partialorder %v900, 8.507059e+37
    %v902 = vand.u32 %v890, 2147483648
    %v903 = vor.u32 1.1754944e-38, %v902
    %v904 = vsel %vm901, %v903, %v899
    %v905 = vmul.f32 1.0, %v904
    %v906 = vadd.f32 %v884, %v233
    %908 = vrot.lane.b32.xlu0 %v906, 64
    %v909 = vpop.permute.xlu0 %908
    %v911 = vmul.f32 %v905, %v909
    %913 = vrot.lane.b32.xlu0 %v911, 64
    %v914 = vpop.permute.xlu0 %913
    %v916 = vadd.f32 %v859, %v914
    %v917 = vtanh.pop %v916
    %v918 = vsub.f32 1.0, %v905
    %920 = vrot.lane.b32.xlu0 %v917, 96
    %v921 = vpop.permute.xlu0 %920
    %v923 = vmul.f32 %v918, %v921
    %v924 = vmul.f32 %v905, %v764
    %v925 = vadd.f32 %v923, %v924
    %v926 = vmul.f32 %v925, %v259
    %928 = vrot.lane.b32.xlu0 %v926, 96
    %v929 = vpop.permute.xlu0 %928
    %v931 = vsel %vm266, %v929, 0.0
    %932 = vadd.xlane.f32.xlu0 %v931
    %v933 = vpop.xlane.xlu0 %932
    %v934 = vadd.f32 %v933, %v270
    %935 = vst.msk [vmem:[%s4 + $0x8] sm:$0x3] %vm272, %v934
    %936 = vmatpush.msra.mxu0 0.0
    %937 = vmatpush.msra.mxu0 0.0
    %938 = vmatpush.msra.mxu0 0.0
    %939 = vmatpush.msra.mxu0 0.0
    %940 = vmatpush.msra.mxu0 0.0
    %941 = vmatpush.msra.mxu0 0.0
    %942 = vmatpush.msra.mxu0 0.0
    %943 = vmatpush.msra.mxu0 0.0
    %944 = vmatpush.msra.mxu0 0.0
    %945 = vmatpush.msra.mxu0 0.0
    %946 = vmatpush.msra.mxu0 0.0
    %947 = vmatpush.msra.mxu0 0.0
    %948 = vmatpush.msra.mxu0 %v44
    %949 = vmatpush.msra.mxu0 %v43
    %950 = vmatpush.msra.mxu0 %v42
    %951 = vmatpush.msra.mxu0 %v41
    %952 = vmatmul.f32.gmra.mxu0 %v839
    %v953 = vpop.f32.mrf.mxu0
    %v954 = vadd.f32 0.0, %v953
    %955 = vdwg.mxu0
    %v957 = vrot.slane %v954, 6
    %v959 = vadd.f32 %v87, %v957
    %v960 = vxor.u32 %v959, 2147483648
    %v961 = vmul.f32 %v960, 1.442695
    %v962 = vpow.pop %v961
    %v963 = vadd.f32 %v962, 1.0
    %v964 = vrcp.pop %v963
    %v965 = vmul.f32 %v963, %v964
    %v966 = vsub.f32 1.0, %v965
    %v967 = vmul.f32 %v964, %v966
    %v968 = vadd.f32 %v964, %v967
    %vm969 = vweird.f32 %v963
    %vm970 = vweird.f32 %v964
    %vm971 = vmor %vm969, %vm970
    %v972 = vsel %vm971, %v964, %v968
    %v973 = vand.u32 2147483647, %v963
    %vm974 = vcmp.eq.f32.partialorder %v973, 8.507059e+37
    %v975 = vand.u32 %v963, 2147483648
    %v976 = vor.u32 1.1754944e-38, %v975
    %v977 = vsel %vm974, %v976, %v972
    %v978 = vmul.f32 1.0, %v977
    %v979 = vadd.f32 %v954, %v138
    %v981 = vrot.slane %v979, 6
    %982 = vrot.lane.b32.xlu0 %v981, 64
    %v983 = vpop.permute.xlu0 %982
    %v985 = vmul.f32 %v978, %v983
    %987 = vrot.lane.b32.xlu0 %v985, 64
    %v988 = vpop.permute.xlu0 %987
    %v990 = vadd.f32 %v87, %v988
    %v991 = vtanh.pop %v990
    %v992 = vsub.f32 1.0, %v978
    %994 = vrot.lane.b32.xlu0 %v991, 96
    %v995 = vpop.permute.xlu0 %994
    %v997 = vmul.f32 %v992, %v995
    %v998 = vrot.slane %v835, 6
    %v1000 = vmul.f32 %v978, %v998
    %v1001 = vadd.f32 %v997, %v1000
    %v1003 = vrot.slane %v1001, 2
    %1004 = vrot.lane.b32.xlu0 %v1003, 96
    %v1005 = vpop.permute.xlu0 %1004
    %v1006 = vsel %vm59, %v1005, 0
    %1008 = vmatpush.msra.mxu0 0.0
    %1009 = vmatpush.msra.mxu0 0.0
    %1010 = vmatpush.msra.mxu0 0.0
    %1011 = vmatpush.msra.mxu0 0.0
    %1012 = vmatpush.msra.mxu0 0.0
    %1013 = vmatpush.msra.mxu0 0.0
    %1014 = vmatpush.msra.mxu0 0.0
    %1015 = vmatpush.msra.mxu0 0.0
    %1016 = vmatpush.msra.mxu0 0.0
    %1017 = vmatpush.msra.mxu0 0.0
    %1018 = vmatpush.msra.mxu0 0.0
    %1019 = vmatpush.msra.mxu0 0.0
    %1020 = vmatpush.msra.mxu0 %v49
    %1021 = vmatpush.msra.mxu0 %v48
    %1022 = vmatpush.msra.mxu0 %v47
    %1023 = vmatpush.msra.mxu0 %v46
    %1024 = vmatmul.f32.gmra.mxu0 %v1006
    %v1025 = vpop.f32.mrf.mxu0
    %v1026 = vadd.f32 %v163, %v1025
    %1027 = vdwg.mxu0
    %1029 = vrot.lane.b32.xlu0 %v925, 96
    %v1030 = vpop.permute.xlu0 %1029
    %v1031 = vsel %vm59, %v1030, 0
    %1033 = vmatpush.msra.mxu0 0.0
    %1034 = vmatpush.msra.mxu0 0.0
    %1035 = vmatpush.msra.mxu0 0.0
    %1036 = vmatpush.msra.mxu0 0.0
    %1037 = vmatpush.msra.mxu0 0.0
    %1038 = vmatpush.msra.mxu0 0.0
    %1039 = vmatpush.msra.mxu0 0.0
    %1040 = vmatpush.msra.mxu0 0.0
    %1041 = vmatpush.msra.mxu0 0.0
    %1042 = vmatpush.msra.mxu0 0.0
    %1043 = vmatpush.msra.mxu0 0.0
    %1044 = vmatpush.msra.mxu0 0.0
    %1045 = vmatpush.msra.mxu0 %v54
    %1046 = vmatpush.msra.mxu0 %v53
    %1047 = vmatpush.msra.mxu0 %v52
    %1048 = vmatpush.msra.mxu0 %v51
    %1049 = vmatmul.f32.gmra.mxu0 %v1031
    %v1050 = vpop.f32.mrf.mxu0
    %v1051 = vadd.f32 0.0, %v1050
    %1052 = vdwg.mxu0
    %v1053 = vadd.f32 %v1026, %v1051
    %v1054 = vxor.u32 %v1053, 2147483648
    %v1055 = vmul.f32 %v1054, 1.442695
    %v1056 = vpow.pop %v1055
    %v1057 = vadd.f32 %v1056, 1.0
    %v1058 = vrcp.pop %v1057
    %v1059 = vmul.f32 %v1057, %v1058
    %v1060 = vsub.f32 1.0, %v1059
    %v1061 = vmul.f32 %v1058, %v1060
    %v1062 = vadd.f32 %v1058, %v1061
    %vm1063 = vweird.f32 %v1057
    %vm1064 = vweird.f32 %v1058
    %vm1065 = vmor %vm1063, %vm1064
    %v1066 = vsel %vm1065, %v1058, %v1062
    %v1067 = vand.u32 2147483647, %v1057
    %vm1068 = vcmp.eq.f32.partialorder %v1067, 8.507059e+37
    %v1069 = vand.u32 %v1057, 2147483648
    %v1070 = vor.u32 1.1754944e-38, %v1069
    %v1071 = vsel %vm1068, %v1070, %v1066
    %v1072 = vmul.f32 1.0, %v1071
    %v1073 = vadd.f32 %v1051, %v233
    %1075 = vrot.lane.b32.xlu0 %v1073, 64
    %v1076 = vpop.permute.xlu0 %1075
    %v1078 = vmul.f32 %v1072, %v1076
    %1080 = vrot.lane.b32.xlu0 %v1078, 64
    %v1081 = vpop.permute.xlu0 %1080
    %v1083 = vadd.f32 %v1026, %v1081
    %v1084 = vtanh.pop %v1083
    %v1085 = vsub.f32 1.0, %v1072
    %1087 = vrot.lane.b32.xlu0 %v1084, 96
    %v1088 = vpop.permute.xlu0 %1087
    %v1090 = vmul.f32 %v1085, %v1088
    %v1091 = vmul.f32 %v1072, %v925
    %v1092 = vadd.f32 %v1090, %v1091
    %v1093 = vmul.f32 %v1092, %v259
    %1095 = vrot.lane.b32.xlu0 %v1093, 96
    %v1096 = vpop.permute.xlu0 %1095
    %v1098 = vsel %vm266, %v1096, 0.0
    %1099 = vadd.xlane.f32.xlu0 %v1098
    %v1100 = vpop.xlane.xlu0 %1099
    %v1101 = vadd.f32 %v1100, %v270
    %1102 = vst.msk [vmem:[%s4 + $0xa] sm:$0x3] %vm272, %v1101
    %1103 = vmatpush.msra.mxu0 0.0
    %1104 = vmatpush.msra.mxu0 0.0
    %1105 = vmatpush.msra.mxu0 0.0
    %1106 = vmatpush.msra.mxu0 0.0
    %1107 = vmatpush.msra.mxu0 0.0
    %1108 = vmatpush.msra.mxu0 0.0
    %1109 = vmatpush.msra.mxu0 0.0
    %1110 = vmatpush.msra.mxu0 0.0
    %1111 = vmatpush.msra.mxu0 0.0
    %1112 = vmatpush.msra.mxu0 0.0
    %1113 = vmatpush.msra.mxu0 0.0
    %1114 = vmatpush.msra.mxu0 0.0
    %1115 = vmatpush.msra.mxu0 %v44
    %1116 = vmatpush.msra.mxu0 %v43
    %1117 = vmatpush.msra.mxu0 %v42
    %1118 = vmatpush.msra.mxu0 %v41
    %1119 = vmatmul.f32.gmra.mxu0 %v1006
    %v1120 = vpop.f32.mrf.mxu0
    %v1121 = vadd.f32 0.0, %v1120
    %1122 = vdwg.mxu0
    %v1124 = vrot.slane %v1121, 4
    %v1126 = vadd.f32 %v87, %v1124
    %v1127 = vxor.u32 %v1126, 2147483648
    %v1128 = vmul.f32 %v1127, 1.442695
    %v1129 = vpow.pop %v1128
    %v1130 = vadd.f32 %v1129, 1.0
    %v1131 = vrcp.pop %v1130
    %v1132 = vmul.f32 %v1130, %v1131
    %v1133 = vsub.f32 1.0, %v1132
    %v1134 = vmul.f32 %v1131, %v1133
    %v1135 = vadd.f32 %v1131, %v1134
    %vm1136 = vweird.f32 %v1130
    %vm1137 = vweird.f32 %v1131
    %vm1138 = vmor %vm1136, %vm1137
    %v1139 = vsel %vm1138, %v1131, %v1135
    %v1140 = vand.u32 2147483647, %v1130
    %vm1141 = vcmp.eq.f32.partialorder %v1140, 8.507059e+37
    %v1142 = vand.u32 %v1130, 2147483648
    %v1143 = vor.u32 1.1754944e-38, %v1142
    %v1144 = vsel %vm1141, %v1143, %v1139
    %v1145 = vmul.f32 1.0, %v1144
    %v1146 = vadd.f32 %v1121, %v138
    %v1148 = vrot.slane %v1146, 4
    %1149 = vrot.lane.b32.xlu0 %v1148, 64
    %v1150 = vpop.permute.xlu0 %1149
    %v1152 = vmul.f32 %v1145, %v1150
    %1154 = vrot.lane.b32.xlu0 %v1152, 64
    %v1155 = vpop.permute.xlu0 %1154
    %v1157 = vadd.f32 %v87, %v1155
    %v1158 = vtanh.pop %v1157
    %v1159 = vsub.f32 1.0, %v1145
    %1161 = vrot.lane.b32.xlu0 %v1158, 96
    %v1162 = vpop.permute.xlu0 %1161
    %v1164 = vmul.f32 %v1159, %v1162
    %v1165 = vrot.slane %v1001, 6
    %v1167 = vmul.f32 %v1145, %v1165
    %v1168 = vadd.f32 %v1164, %v1167
    %v1170 = vrot.slane %v1168, 4
    %1171 = vrot.lane.b32.xlu0 %v1170, 96
    %v1172 = vpop.permute.xlu0 %1171
    %v1173 = vsel %vm59, %v1172, 0
    %1175 = vmatpush.msra.mxu0 0.0
    %1176 = vmatpush.msra.mxu0 0.0
    %1177 = vmatpush.msra.mxu0 0.0
    %1178 = vmatpush.msra.mxu0 0.0
    %1179 = vmatpush.msra.mxu0 0.0
    %1180 = vmatpush.msra.mxu0 0.0
    %1181 = vmatpush.msra.mxu0 0.0
    %1182 = vmatpush.msra.mxu0 0.0
    %1183 = vmatpush.msra.mxu0 0.0
    %1184 = vmatpush.msra.mxu0 0.0
    %1185 = vmatpush.msra.mxu0 0.0
    %1186 = vmatpush.msra.mxu0 0.0
    %1187 = vmatpush.msra.mxu0 %v49
    %1188 = vmatpush.msra.mxu0 %v48
    %1189 = vmatpush.msra.mxu0 %v47
    %1190 = vmatpush.msra.mxu0 %v46
    %1191 = vmatmul.f32.gmra.mxu0 %v1173
    %v1192 = vpop.f32.mrf.mxu0
    %v1193 = vadd.f32 %v163, %v1192
    %1194 = vdwg.mxu0
    %1196 = vrot.lane.b32.xlu0 %v1092, 96
    %v1197 = vpop.permute.xlu0 %1196
    %v1198 = vsel %vm59, %v1197, 0
    %1200 = vmatpush.msra.mxu0 0.0
    %1201 = vmatpush.msra.mxu0 0.0
    %1202 = vmatpush.msra.mxu0 0.0
    %1203 = vmatpush.msra.mxu0 0.0
    %1204 = vmatpush.msra.mxu0 0.0
    %1205 = vmatpush.msra.mxu0 0.0
    %1206 = vmatpush.msra.mxu0 0.0
    %1207 = vmatpush.msra.mxu0 0.0
    %1208 = vmatpush.msra.mxu0 0.0
    %1209 = vmatpush.msra.mxu0 0.0
    %1210 = vmatpush.msra.mxu0 0.0
    %1211 = vmatpush.msra.mxu0 0.0
    %1212 = vmatpush.msra.mxu0 %v54
    %1213 = vmatpush.msra.mxu0 %v53
    %1214 = vmatpush.msra.mxu0 %v52
    %1215 = vmatpush.msra.mxu0 %v51
    %1216 = vmatmul.f32.gmra.mxu0 %v1198
    %v1217 = vpop.f32.mrf.mxu0
    %v1218 = vadd.f32 0.0, %v1217
    %1219 = vdwg.mxu0
    %v1220 = vadd.f32 %v1193, %v1218
    %v1221 = vxor.u32 %v1220, 2147483648
    %v1222 = vmul.f32 %v1221, 1.442695
    %v1223 = vpow.pop %v1222
    %v1224 = vadd.f32 %v1223, 1.0
    %v1225 = vrcp.pop %v1224
    %v1226 = vmul.f32 %v1224, %v1225
    %v1227 = vsub.f32 1.0, %v1226
    %v1228 = vmul.f32 %v1225, %v1227
    %v1229 = vadd.f32 %v1225, %v1228
    %vm1230 = vweird.f32 %v1224
    %vm1231 = vweird.f32 %v1225
    %vm1232 = vmor %vm1230, %vm1231
    %v1233 = vsel %vm1232, %v1225, %v1229
    %v1234 = vand.u32 2147483647, %v1224
    %vm1235 = vcmp.eq.f32.partialorder %v1234, 8.507059e+37
    %v1236 = vand.u32 %v1224, 2147483648
    %v1237 = vor.u32 1.1754944e-38, %v1236
    %v1238 = vsel %vm1235, %v1237, %v1233
    %v1239 = vmul.f32 1.0, %v1238
    %v1240 = vadd.f32 %v1218, %v233
    %1242 = vrot.lane.b32.xlu0 %v1240, 64
    %v1243 = vpop.permute.xlu0 %1242
    %v1245 = vmul.f32 %v1239, %v1243
    %1247 = vrot.lane.b32.xlu0 %v1245, 64
    %v1248 = vpop.permute.xlu0 %1247
    %v1250 = vadd.f32 %v1193, %v1248
    %v1251 = vtanh.pop %v1250
    %v1252 = vsub.f32 1.0, %v1239
    %1254 = vrot.lane.b32.xlu0 %v1251, 96
    %v1255 = vpop.permute.xlu0 %1254
    %v1257 = vmul.f32 %v1252, %v1255
    %v1258 = vmul.f32 %v1239, %v1092
    %v1259 = vadd.f32 %v1257, %v1258
    %v1260 = vmul.f32 %v1259, %v259
    %1262 = vrot.lane.b32.xlu0 %v1260, 96
    %v1263 = vpop.permute.xlu0 %1262
    %v1265 = vsel %vm266, %v1263, 0.0
    %1266 = vadd.xlane.f32.xlu0 %v1265
    %v1267 = vpop.xlane.xlu0 %1266
    %v1268 = vadd.f32 %v1267, %v270
    %1269 = vst.msk [vmem:[%s4 + $0xc] sm:$0x3] %vm272, %v1268
    %1270 = vmatpush.msra.mxu0 0.0
    %1271 = vmatpush.msra.mxu0 0.0
    %1272 = vmatpush.msra.mxu0 0.0
    %1273 = vmatpush.msra.mxu0 0.0
    %1274 = vmatpush.msra.mxu0 0.0
    %1275 = vmatpush.msra.mxu0 0.0
    %1276 = vmatpush.msra.mxu0 0.0
    %1277 = vmatpush.msra.mxu0 0.0
    %1278 = vmatpush.msra.mxu0 0.0
    %1279 = vmatpush.msra.mxu0 0.0
    %1280 = vmatpush.msra.mxu0 0.0
    %1281 = vmatpush.msra.mxu0 0.0
    %1282 = vmatpush.msra.mxu0 %v44
    %1283 = vmatpush.msra.mxu0 %v43
    %1284 = vmatpush.msra.mxu0 %v42
    %1285 = vmatpush.msra.mxu0 %v41
    %1286 = vmatmul.f32.gmra.mxu0 %v1173
    %v1287 = vpop.f32.mrf.mxu0
    %v1288 = vadd.f32 0.0, %v1287
    %1289 = vdwg.mxu0
    %v1291 = vrot.slane %v1288, 2
    %v1293 = vadd.f32 %v87, %v1291
    %v1294 = vxor.u32 %v1293, 2147483648
    %v1295 = vmul.f32 %v1294, 1.442695
    %v1296 = vpow.pop %v1295
    %v1297 = vadd.f32 %v1296, 1.0
    %v1298 = vrcp.pop %v1297
    %v1299 = vmul.f32 %v1297, %v1298
    %v1300 = vsub.f32 1.0, %v1299
    %v1301 = vmul.f32 %v1298, %v1300
    %v1302 = vadd.f32 %v1298, %v1301
    %vm1303 = vweird.f32 %v1297
    %vm1304 = vweird.f32 %v1298
    %vm1305 = vmor %vm1303, %vm1304
    %v1306 = vsel %vm1305, %v1298, %v1302
    %v1307 = vand.u32 2147483647, %v1297
    %vm1308 = vcmp.eq.f32.partialorder %v1307, 8.507059e+37
    %v1309 = vand.u32 %v1297, 2147483648
    %v1310 = vor.u32 1.1754944e-38, %v1309
    %v1311 = vsel %vm1308, %v1310, %v1306
    %v1312 = vmul.f32 1.0, %v1311
    %v1313 = vadd.f32 %v1288, %v138
    %v1315 = vrot.slane %v1313, 2
    %1316 = vrot.lane.b32.xlu0 %v1315, 64
    %v1317 = vpop.permute.xlu0 %1316
    %v1319 = vmul.f32 %v1312, %v1317
    %1321 = vrot.lane.b32.xlu0 %v1319, 64
    %v1322 = vpop.permute.xlu0 %1321
    %v1324 = vadd.f32 %v87, %v1322
    %v1325 = vtanh.pop %v1324
    %v1326 = vsub.f32 1.0, %v1312
    %1328 = vrot.lane.b32.xlu0 %v1325, 96
    %v1329 = vpop.permute.xlu0 %1328
    %v1331 = vmul.f32 %v1326, %v1329
    %v1332 = vrot.slane %v1168, 6
    %v1334 = vmul.f32 %v1312, %v1332
    %v1335 = vadd.f32 %v1331, %v1334
    %v1337 = vrot.slane %v1335, 6
    %1338 = vrot.lane.b32.xlu0 %v1337, 96
    %v1339 = vpop.permute.xlu0 %1338
    %v1340 = vsel %vm59, %v1339, 0
    %1342 = vmatpush.msra.mxu0 0.0
    %1343 = vmatpush.msra.mxu0 0.0
    %1344 = vmatpush.msra.mxu0 0.0
    %1345 = vmatpush.msra.mxu0 0.0
    %1346 = vmatpush.msra.mxu0 0.0
    %1347 = vmatpush.msra.mxu0 0.0
    %1348 = vmatpush.msra.mxu0 0.0
    %1349 = vmatpush.msra.mxu0 0.0
    %1350 = vmatpush.msra.mxu0 0.0
    %1351 = vmatpush.msra.mxu0 0.0
    %1352 = vmatpush.msra.mxu0 0.0
    %1353 = vmatpush.msra.mxu0 0.0
    %1354 = vmatpush.msra.mxu0 %v49
    %1355 = vmatpush.msra.mxu0 %v48
    %1356 = vmatpush.msra.mxu0 %v47
    %1357 = vmatpush.msra.mxu0 %v46
    %1358 = vmatmul.f32.gmra.mxu0 %v1340
    %v1359 = vpop.f32.mrf.mxu0
    %v1360 = vadd.f32 %v163, %v1359
    %1361 = vdwg.mxu0
    %1363 = vrot.lane.b32.xlu0 %v1259, 96
    %v1364 = vpop.permute.xlu0 %1363
    %v1365 = vsel %vm59, %v1364, 0
    %1367 = vmatpush.msra.mxu0 0.0
    %1368 = vmatpush.msra.mxu0 0.0
    %1369 = vmatpush.msra.mxu0 0.0
    %1370 = vmatpush.msra.mxu0 0.0
    %1371 = vmatpush.msra.mxu0 0.0
    %1372 = vmatpush.msra.mxu0 0.0
    %1373 = vmatpush.msra.mxu0 0.0
    %1374 = vmatpush.msra.mxu0 0.0
    %1375 = vmatpush.msra.mxu0 0.0
    %1376 = vmatpush.msra.mxu0 0.0
    %1377 = vmatpush.msra.mxu0 0.0
    %1378 = vmatpush.msra.mxu0 0.0
    %1379 = vmatpush.msra.mxu0 %v54
    %1380 = vmatpush.msra.mxu0 %v53
    %1381 = vmatpush.msra.mxu0 %v52
    %1382 = vmatpush.msra.mxu0 %v51
    %1383 = vmatmul.f32.gmra.mxu0 %v1365
    %v1384 = vpop.f32.mrf.mxu0
    %v1385 = vadd.f32 0.0, %v1384
    %1386 = vdwg.mxu0
    %v1387 = vadd.f32 %v1360, %v1385
    %v1388 = vxor.u32 %v1387, 2147483648
    %v1389 = vmul.f32 %v1388, 1.442695
    %v1390 = vpow.pop %v1389
    %v1391 = vadd.f32 %v1390, 1.0
    %v1392 = vrcp.pop %v1391
    %v1393 = vmul.f32 %v1391, %v1392
    %v1394 = vsub.f32 1.0, %v1393
    %v1395 = vmul.f32 %v1392, %v1394
    %v1396 = vadd.f32 %v1392, %v1395
    %vm1397 = vweird.f32 %v1391
    %vm1398 = vweird.f32 %v1392
    %vm1399 = vmor %vm1397, %vm1398
    %v1400 = vsel %vm1399, %v1392, %v1396
    %v1401 = vand.u32 2147483647, %v1391
    %vm1402 = vcmp.eq.f32.partialorder %v1401, 8.507059e+37
    %v1403 = vand.u32 %v1391, 2147483648
    %v1404 = vor.u32 1.1754944e-38, %v1403
    %v1405 = vsel %vm1402, %v1404, %v1400
    %v1406 = vmul.f32 1.0, %v1405
    %v1407 = vadd.f32 %v1385, %v233
    %1409 = vrot.lane.b32.xlu0 %v1407, 64
    %v1410 = vpop.permute.xlu0 %1409
    %v1412 = vmul.f32 %v1406, %v1410
    %1414 = vrot.lane.b32.xlu0 %v1412, 64
    %v1415 = vpop.permute.xlu0 %1414
    %v1417 = vadd.f32 %v1360, %v1415
    %v1418 = vtanh.pop %v1417
    %v1419 = vsub.f32 1.0, %v1406
    %1421 = vrot.lane.b32.xlu0 %v1418, 96
    %v1422 = vpop.permute.xlu0 %1421
    %v1424 = vmul.f32 %v1419, %v1422
    %v1425 = vmul.f32 %v1406, %v1259
    %v1426 = vadd.f32 %v1424, %v1425
    %v1427 = vmul.f32 %v1426, %v259
    %1429 = vrot.lane.b32.xlu0 %v1427, 96
    %v1430 = vpop.permute.xlu0 %1429
    %v1432 = vsel %vm266, %v1430, 0.0
    %1433 = vadd.xlane.f32.xlu0 %v1432
    %v1434 = vpop.xlane.xlu0 %1433
    %v1435 = vadd.f32 %v1434, %v270
    %1436 = vst.msk [vmem:[%s4 + $0xe] sm:$0x3] %vm272, %v1435
    %1437 = vrot.lane.b32.xlu0 %v1335, 96
    %v1438 = vpop.permute.xlu0 %1437
    %vm1440 = vcmask 261126
    %1441 = vst.msk [vmem:[#allocation5 - $0x6] sm:$0xc0] %vm1440, %v1438
    %1443 = vrot.lane.b32.xlu0 %v1426, 96
    %v1444 = vpop.permute.xlu0 %1443
    %s1446 = scalar_lea.vmem [#allocation5], 2
    %1447 = vst.msk [vmem:[%s1446] sm:$0x3] %vm266, %v1444
    // Predicated region
    $region22: #{rnn_forward.1} parent=1 // pred_check
      _
    $region23: #{rnn_forward.1} parent=1 // pred_check_branch
      %1449 = sbr.rel (0) target = $region25
    $region24: #{rnn_forward.1} parent=1 // pred_region
      _
    $region25: #{rnn_forward.1} parent=1 // pred_fallthru
      _
    // Predicated region
    $region26: #{rnn_forward.1} parent=1 // pred_check
      _
    $region27: #{rnn_forward.1} parent=1 // pred_check_branch
      %1451 = sbr.rel (0) target = $region29
    $region28: #{rnn_forward.1} parent=1 // pred_region
      %1453 = vsyncadd [#allocation4], 0
      %s1454 = sshll.u32 [#allocation5], 4
      %s1455 = int_to_ptr.vmem [resolvable:$true] %s1454
      %s1456 = sshll.u32 %s5, 4
      %s1457 = int_to_ptr.hbm [resolvable:$true] %s1456
      %1462 = dma.vmem_to_hbm [thread:$0]  %s1455, 64, %s1457, [#allocation4], 32, 32, 2
    $region29: #{rnn_forward.1} parent=1 // pred_fallthru
      _
    // Predicated region
    $region30: #{rnn_forward.1} parent=1 // pred_check
      _
    $region31: #{rnn_forward.1} parent=1 // pred_check_branch
      %1464 = sbr.rel (0) target = $region33
    $region32: #{rnn_forward.1} parent=1 // pred_region
      _
    $region33: #{rnn_forward.1} parent=1 // pred_fallthru
      _
    // Predicated region
    $region34: #{rnn_forward.1} parent=1 // pred_check
      _
    $region35: #{rnn_forward.1} parent=1 // pred_check_branch
      %1466 = sbr.rel (0) target = $region37
    $region36: #{rnn_forward.1} parent=1 // pred_region
      %1468 = dma.done [#allocation4], 64
    $region37: #{rnn_forward.1} parent=1 // pred_fallthru
      _
    %1469 = vsyncpa [#allocation3], 1
    %1470 = vsyncpa [#allocation4], 1

</llo_original>
